<compile_context>
chip_gen: v7x
topology: tpu7x:2x2x1
jax: 0.10.0
libtpu: 0.0.40
codegen_flags: <defaults>
</compile_context>

<pallas_src>
import math
import jax
import jax.numpy as jnp
from jax.experimental import pallas as pl
from jax.experimental.pallas import tpu as pltpu


def _round_up(v, a):
    return -(-v // a) * a


def _physical_vmem_bytes():
    try:
        return int(pltpu.get_tpu_info().vmem_capacity_bytes)
    except Exception:
        return 128 * 1024 * 1024  # v5e/v6e default; only used as a clamp


def _make_fused_mlp_kernel(num_layers, compute_dtype):
    """kernel(x_ref, w0_ref, b0_ref, w1_ref, b1_ref, ..., o_ref): full MLP on one batch tile."""

    def kernel(*refs):
        x_ref = refs[0]
        o_ref = refs[-1]
        wb_refs = refs[1:-1]

        h = x_ref[...].astype(compute_dtype)               # MXU-friendly operand dtype
        for l in range(num_layers):                        # statically unrolled
            w_ref = wb_refs[2 * l]                         # (d_l, d_{l+1}), compute_dtype
            b_ref = wb_refs[2 * l + 1]                     # (1, d_{l+1}), f32
            acc = jnp.dot(h, w_ref[...], preferred_element_type=jnp.float32)
            act = jnp.maximum(acc + b_ref[...], 0.0)       # bias + ReLU in f32
            h = act if l == num_layers - 1 else act.astype(compute_dtype)
        o_ref[...] = h.astype(o_ref.dtype)

    return kernel


def prepare_params(weights, biases, compute_dtype=jnp.bfloat16):
    """One-time layout/dtype prep, hoisted out of the forward hot path.

    weights[l]: torch layout (out, in) -> (in, out) in compute_dtype (MXU operand).
    biases[l]:  (out,)                 -> (1, out) in f32 (bias + ReLU stay f32).
    """
    wts = [jnp.asarray(w).T.astype(compute_dtype) for w in weights]
    bts = [jnp.asarray(b, jnp.float32).reshape(1, -1) for b in biases]
    return wts, bts


def mlp_forward(x, wts, bts, *, block_m=512):
    """Fused apex MLP.forward.  `wts`/`bts` come from prepare_params()."""
    M, d_in = x.shape
    num_layers = len(wts)
    dims = [d_in] + [w.shape[1] for w in wts]
    for l, (w, b) in enumerate(zip(wts, bts)):
        assert w.shape == (dims[l], dims[l + 1]), "weight shape mismatch"
        assert b.shape == (1, dims[l + 1]), "bias shape mismatch"

    compute_dtype = wts[0].dtype
    c_size = jnp.dtype(compute_dtype).itemsize
    out_dtype = x.dtype
    row_align = 16 if c_size == 2 else 8                   # bf16 packs 16 rows per vreg

    # Batch tile: as big as possible (amortize ~0.35us/step, keep the MXU fed) but
    # split into >=2 grid steps when the batch allows it so v7x's two TensorCores both
    # get work; the extra grid step is nearly free on single-TC v5e/v6e.
    m_cap = _round_up(M, row_align)
    target = m_cap if m_cap <= row_align else _round_up(pl.cdiv(M, 2), row_align)
    tm = max(row_align, min(block_m, m_cap, target))
    grid = (pl.cdiv(M, tm),)        # ragged last block: padded reads, masked writes

    flat_params = []
    for w2, b2 in zip(wts, bts):
        flat_params.extend([w2, b2])

    flops = int(sum(2 * M * dims[l] * dims[l + 1] for l in range(num_layers)))
    bytes_accessed = int(
        M * d_in * jnp.dtype(x.dtype).itemsize
        + sum(dims[l] * dims[l + 1] for l in range(num_layers)) * c_size
        + sum(dims[1:]) * 4
        + M * dims[-1] * jnp.dtype(out_dtype).itemsize)

    phys_vmem = _physical_vmem_bytes()

    def _attempt(single_buffer):
        # Constant block index -> weight/bias stays resident in VMEM across grid steps;
        # with a constant index there is nothing to prefetch, so request 1 buffer.
        wb_kwargs = dict(pipeline_mode=pl.Buffered(1)) if single_buffer else {}

        in_specs = [pl.BlockSpec((tm, d_in), lambda i: (i, 0))]
        for l in range(num_layers):
            in_specs.append(
                pl.BlockSpec((dims[l], dims[l + 1]), lambda i: (0, 0), **wb_kwargs))
            in_specs.append(
                pl.BlockSpec((1, dims[l + 1]), lambda i: (0, 0), **wb_kwargs))
        out_specs = pl.BlockSpec((tm, dims[-1]), lambda i: (i, 0))

        wb_buffers = 1 if single_buffer else 2
        needed = (
            wb_buffers * (sum(dims[l] * dims[l + 1] for l in range(num_layers)) * c_size
                          + sum(dims[1:]) * 4)
            + 2 * tm * d_in * jnp.dtype(x.dtype).itemsize          # double-buffered x tile
            + 2 * tm * dims[-1] * jnp.dtype(out_dtype).itemsize    # double-buffered out tile
            + tm * max(dims) * (4 + c_size)                        # widest f32 acc + bf16 copy
            + (4 << 20))                                           # slack
        vmem_limit = int(min(int(phys_vmem * 0.85), max(needed, 32 * 1024 * 1024)))

        # TODO(synk): if `needed` exceeds the per-generation VMEM budget (esp. v7x's
        # 64 MiB), add a K/N grid axis ("arbitrary" last) with a f32 VMEM accumulator
        # and pl.when init/finalize instead of keeping every full weight resident.

        return pl.pallas_call(
            _make_fused_mlp_kernel(num_layers, compute_dtype),
            out_shape=jax.ShapeDtypeStruct((M, dims[-1]), out_dtype),
            grid_spec=pltpu.PrefetchScalarGridSpec(
                num_scalar_prefetch=0,
                grid=grid,
                in_specs=in_specs,
                out_specs=out_specs,
            ),
            compiler_params=pltpu.CompilerParams(
                dimension_semantics=("parallel",),
                vmem_limit_bytes=vmem_limit,
            ),
            cost_estimate=pl.CostEstimate(
                flops=flops, transcendentals=0, bytes_accessed=bytes_accessed),
        )(x, *flat_params)

    last_err = None
    for single_buffer in (True, False):   # fall back to default double-buffered specs
        try:
            return _attempt(single_buffer)
        except Exception as e:  # noqa: BLE001 - retry without pl.Buffered(1)
            last_err = e
    raise last_err


def init_mlp_params(key, mlp_sizes, dtype=jnp.float32):
    """Deterministic re-implementation of MLP.reset_parameters() (torch layout)."""
    num_layers = len(mlp_sizes) - 1
    weights, biases = [], []
    for i in range(num_layers):
        key, kw, kb = jax.random.split(key, 3)
        out_f, in_f = mlp_sizes[i + 1], mlp_sizes[i]
        w_std = math.sqrt(2.0 / float(out_f + in_f))
        b_std = math.sqrt(1.0 / float(out_f))
        weights.append(jax.random.normal(kw, (out_f, in_f), dtype) * w_std)
        biases.append(jax.random.normal(kb, (out_f,), dtype) * b_std)
    return weights, biases


def _reference_f32(x, weights, biases):
    y = x
    for w, b in zip(weights, biases):
        y = jnp.maximum(y @ w.T + b, 0.0)
    return y


def _reference_matched(x, wts, bts):
    """Pure-JAX reference that mirrors the kernel's mixed-precision math."""
    h = x
    for w2, b2 in zip(wts, bts):
        acc = jnp.dot(h.astype(w2.dtype), w2, preferred_element_type=jnp.float32)
        h = jnp.maximum(acc + b2, 0.0)
    return h.astype(x.dtype)


if __name__ == "__main__":
    key = jax.random.PRNGKey(0)

    # Case 1: MLP([256, 512, 256]), batch 128 (batch split into 2 "parallel" tiles).
    mlp_sizes = [256, 512, 256]
    batch = 128
    key, kx = jax.random.split(key)
    x = jax.random.normal(kx, (batch, mlp_sizes[0]), jnp.float32)
    key, kp = jax.random.split(key)
    weights, biases = init_mlp_params(kp, mlp_sizes)
    wts, bts = prepare_params(weights, biases)            # one-time layout/dtype prep

    out = jax.block_until_ready(mlp_forward(x, wts, bts))
    assert out.shape == (batch, mlp_sizes[-1])
    ref_m = _reference_matched(x, wts, bts)
    ref_f = _reference_f32(x, weights, biases)
    assert jnp.allclose(out, ref_m, atol=2e-3, rtol=2e-3), "mismatch vs matched (bf16) ref"
    assert jnp.allclose(out, ref_f, atol=6e-2, rtol=6e-2), "mismatch vs f32 ref"

    # Case 2: non-divisible batch, 3 layers, a non-128-multiple hidden width (ragged
    # last block + multi-tile grid, no wrapper-side pad/slice).
    mlp_sizes2 = [256, 512, 384, 256]
    batch2 = 100
    key, kx2 = jax.random.split(key)
    x2 = jax.random.normal(kx2, (batch2, mlp_sizes2[0]), jnp.float32)
    key, kp2 = jax.random.split(key)
    weights2, biases2 = init_mlp_params(kp2, mlp_sizes2)
    wts2, bts2 = prepare_params(weights2, biases2)

    out2 = jax.block_until_ready(mlp_forward(x2, wts2, bts2, block_m=64))
    assert out2.shape == (batch2, mlp_sizes2[-1])
    ref_m2 = _reference_matched(x2, wts2, bts2)
    ref_f2 = _reference_f32(x2, weights2, biases2)
    assert jnp.allclose(out2, ref_m2, atol=2e-3, rtol=2e-3), "mismatch vs matched (bf16) ref"
    assert jnp.allclose(out2, ref_f2, atol=6e-2, rtol=6e-2), "mismatch vs f32 ref"

    print("KERNEL_OK")
</pallas_src>

<mosaic_0001>
module attributes {stable_mosaic.version = 11 : i64} {
  func.func @kernel(%arg0: i32, %arg1: memref<64x256xf32, #tpu.memory_space<vmem>>, %arg2: memref<256x512xbf16, #tpu.memory_space<vmem>>, %arg3: memref<1x512xf32, #tpu.memory_space<vmem>>, %arg4: memref<512x256xbf16, #tpu.memory_space<vmem>>, %arg5: memref<1x256xf32, #tpu.memory_space<vmem>>, %arg6: memref<64x256xf32, #tpu.memory_space<vmem>>) attributes {dimension_semantics = [#tpu.dimension_semantics<parallel>], iteration_bounds = array<i64: 2>, scalar_prefetch = 0 : i64, scratch_operands = 0 : i64, tpu.core_type = #tpu.core_type<tc>, window_params = [{transform_indices = @transform_0, window_bounds = array<i64: 64, 256>}, {pipeline_mode = #tpu.pipeline_mode<synchronous>, transform_indices = @transform_1, window_bounds = array<i64: 256, 512>}, {pipeline_mode = #tpu.pipeline_mode<synchronous>, transform_indices = @transform_2, window_bounds = array<i64: 1, 512>}, {pipeline_mode = #tpu.pipeline_mode<synchronous>, transform_indices = @transform_3, window_bounds = array<i64: 512, 256>}, {pipeline_mode = #tpu.pipeline_mode<synchronous>, transform_indices = @transform_4, window_bounds = array<i64: 1, 256>}, {transform_indices = @transform_5, window_bounds = array<i64: 64, 256>}]} {
    %c0 = arith.constant 0 : index
    %c0_0 = arith.constant 0 : index
    %0 = vector.load %arg1[%c0, %c0_0] : memref<64x256xf32, #tpu.memory_space<vmem>>, vector<64x256xf32>
    %1 = arith.truncf %0 : vector<64x256xf32> to vector<64x256xbf16>
    %c0_1 = arith.constant 0 : index
    %c0_2 = arith.constant 0 : index
    %2 = vector.load %arg2[%c0_1, %c0_2] : memref<256x512xbf16, #tpu.memory_space<vmem>>, vector<256x512xbf16>
    %cst = arith.constant dense<0.000000e+00> : vector<64x512xf32>
    %3 = tpu.matmul %1, %2, %cst {dimension_numbers = #tpu.dot_dimension_numbers<[1], [0], [0], [1], [0, 0, 1, 1], [], []>} : vector<64x256xbf16>, vector<256x512xbf16>, vector<64x512xf32> -> vector<64x512xf32>
    %c0_3 = arith.constant 0 : index
    %c0_4 = arith.constant 0 : index
    %4 = vector.load %arg3[%c0_3, %c0_4] : memref<1x512xf32, #tpu.memory_space<vmem>>, vector<1x512xf32>
    %5 = vector.broadcast %4 : vector<1x512xf32> to vector<64x512xf32>
    %6 = arith.addf %3, %5 : vector<64x512xf32>
    %cst_5 = arith.constant 0.000000e+00 : f32
    %7 = vector.broadcast %cst_5 : f32 to vector<64x512xf32>
    %8 = arith.maximumf %6, %7 : vector<64x512xf32>
    %9 = arith.truncf %8 : vector<64x512xf32> to vector<64x512xbf16>
    %c0_6 = arith.constant 0 : index
    %c0_7 = arith.constant 0 : index
    %10 = vector.load %arg4[%c0_6, %c0_7] : memref<512x256xbf16, #tpu.memory_space<vmem>>, vector<512x256xbf16>
    %cst_8 = arith.constant dense<0.000000e+00> : vector<64x256xf32>
    %11 = tpu.matmul %9, %10, %cst_8 {dimension_numbers = #tpu.dot_dimension_numbers<[1], [0], [0], [1], [0, 0, 1, 1], [], []>} : vector<64x512xbf16>, vector<512x256xbf16>, vector<64x256xf32> -> vector<64x256xf32>
    %c0_9 = arith.constant 0 : index
    %c0_10 = arith.constant 0 : index
    %12 = vector.load %arg5[%c0_9, %c0_10] : memref<1x256xf32, #tpu.memory_space<vmem>>, vector<1x256xf32>
    %13 = vector.broadcast %12 : vector<1x256xf32> to vector<64x256xf32>
    %14 = arith.addf %11, %13 : vector<64x256xf32>
    %cst_11 = arith.constant 0.000000e+00 : f32
    %15 = vector.broadcast %cst_11 : f32 to vector<64x256xf32>
    %16 = arith.maximumf %14, %15 : vector<64x256xf32>
    %c0_12 = arith.constant 0 : index
    %c0_13 = arith.constant 0 : index
    %17 = vector.load %arg6[%c0_12, %c0_13] : memref<64x256xf32, #tpu.memory_space<vmem>>, vector<64x256xf32>
    tpu.vector_store %arg6[%c0_12, %c0_13], %16 {strides = array<i32>} : memref<64x256xf32, #tpu.memory_space<vmem>>, vector<64x256xf32>,
    return
  }
  func.func @transform_0(%arg0: i32) -> (i32, i32) {
    %c0_i32 = arith.constant 0 : i32
    %c0_i32_0 = arith.constant 0 : i32
    return %arg0, %c0_i32 : i32, i32
  }
  func.func @transform_1(%arg0: i32) -> (i32, i32) {
    %c0_i32 = arith.constant 0 : i32
    %c0_i32_0 = arith.constant 0 : i32
    %c0_i32_1 = arith.constant 0 : i32
    return %c0_i32, %c0_i32_0 : i32, i32
  }
  func.func @transform_2(%arg0: i32) -> (i32, i32) {
    %c0_i32 = arith.constant 0 : i32
    %c0_i32_0 = arith.constant 0 : i32
    %c0_i32_1 = arith.constant 0 : i32
    return %c0_i32, %c0_i32_0 : i32, i32
  }
  func.func @transform_3(%arg0: i32) -> (i32, i32) {
    %c0_i32 = arith.constant 0 : i32
    %c0_i32_0 = arith.constant 0 : i32
    %c0_i32_1 = arith.constant 0 : i32
    return %c0_i32, %c0_i32_0 : i32, i32
  }
  func.func @transform_4(%arg0: i32) -> (i32, i32) {
    %c0_i32 = arith.constant 0 : i32
    %c0_i32_0 = arith.constant 0 : i32
    %c0_i32_1 = arith.constant 0 : i32
    return %c0_i32, %c0_i32_0 : i32, i32
  }
  func.func @transform_5(%arg0: i32) -> (i32, i32) {
    %c0_i32 = arith.constant 0 : i32
    %c0_i32_0 = arith.constant 0 : i32
    return %arg0, %c0_i32 : i32, i32
  }
}

module attributes {stable_mosaic.version = 11 : i64} {
  func.func @kernel(%arg0: i32, %arg1: memref<64x256xf32, #tpu.memory_space<vmem>>, %arg2: memref<256x512xbf16, #tpu.memory_space<vmem>>, %arg3: memref<1x512xf32, #tpu.memory_space<vmem>>, %arg4: memref<512x256xbf16, #tpu.memory_space<vmem>>, %arg5: memref<1x256xf32, #tpu.memory_space<vmem>>, %arg6: memref<64x256xf32, #tpu.memory_space<vmem>>) attributes {dimension_semantics = [#tpu.dimension_semantics<parallel>], iteration_bounds = array<i64: 2>, scalar_prefetch = 0 : i64, scratch_operands = 0 : i64, tpu.core_type = #tpu.core_type<tc>, window_params = [{transform_indices = @transform_0, window_bounds = array<i64: 64, 256>}, {pipeline_mode = #tpu.pipeline_mode<synchronous>, transform_indices = @transform_1, window_bounds = array<i64: 256, 512>}, {pipeline_mode = #tpu.pipeline_mode<synchronous>, transform_indices = @transform_2, window_bounds = array<i64: 1, 512>}, {pipeline_mode = #tpu.pipeline_mode<synchronous>, transform_indices = @transform_3, window_bounds = array<i64: 512, 256>}, {pipeline_mode = #tpu.pipeline_mode<synchronous>, transform_indices = @transform_4, window_bounds = array<i64: 1, 256>}, {transform_indices = @transform_5, window_bounds = array<i64: 64, 256>}]} {
    %c0 = arith.constant 0 : index
    %c0_0 = arith.constant 0 : index
    %0 = vector.load %arg1[%c0, %c0_0] : memref<64x256xf32, #tpu.memory_space<vmem>>, vector<64x256xf32>
    %1 = arith.truncf %0 : vector<64x256xf32> to vector<64x256xbf16>
    %c0_1 = arith.constant 0 : index
    %c0_2 = arith.constant 0 : index
    %2 = vector.load %arg2[%c0_1, %c0_2] : memref<256x512xbf16, #tpu.memory_space<vmem>>, vector<256x512xbf16>
    %cst = arith.constant dense<0.000000e+00> : vector<64x512xf32>
    %3 = tpu.matmul %1, %2, %cst {dimension_numbers = #tpu.dot_dimension_numbers<[1], [0], [0], [1], [0, 0, 1, 1], [], []>} : vector<64x256xbf16>, vector<256x512xbf16>, vector<64x512xf32> -> vector<64x512xf32>
    %c0_3 = arith.constant 0 : index
    %c0_4 = arith.constant 0 : index
    %4 = vector.load %arg3[%c0_3, %c0_4] : memref<1x512xf32, #tpu.memory_space<vmem>>, vector<1x512xf32>
    %5 = vector.broadcast %4 : vector<1x512xf32> to vector<64x512xf32>
    %6 = arith.addf %3, %5 : vector<64x512xf32>
    %cst_5 = arith.constant 0.000000e+00 : f32
    %7 = vector.broadcast %cst_5 : f32 to vector<64x512xf32>
    %8 = arith.maximumf %6, %7 : vector<64x512xf32>
    %9 = arith.truncf %8 : vector<64x512xf32> to vector<64x512xbf16>
    %c0_6 = arith.constant 0 : index
    %c0_7 = arith.constant 0 : index
    %10 = vector.load %arg4[%c0_6, %c0_7] : memref<512x256xbf16, #tpu.memory_space<vmem>>, vector<512x256xbf16>
    %cst_8 = arith.constant dense<0.000000e+00> : vector<64x256xf32>
    %11 = tpu.matmul %9, %10, %cst_8 {dimension_numbers = #tpu.dot_dimension_numbers<[1], [0], [0], [1], [0, 0, 1, 1], [], []>} : vector<64x512xbf16>, vector<512x256xbf16>, vector<64x256xf32> -> vector<64x256xf32>
    %c0_9 = arith.constant 0 : index
    %c0_10 = arith.constant 0 : index
    %12 = vector.load %arg5[%c0_9, %c0_10] : memref<1x256xf32, #tpu.memory_space<vmem>>, vector<1x256xf32>
    %13 = vector.broadcast %12 : vector<1x256xf32> to vector<64x256xf32>
    %14 = arith.addf %11, %13 : vector<64x256xf32>
    %cst_11 = arith.constant 0.000000e+00 : f32
    %15 = vector.broadcast %cst_11 : f32 to vector<64x256xf32>
    %16 = arith.maximumf %14, %15 : vector<64x256xf32>
    %c0_12 = arith.constant 0 : index
    %c0_13 = arith.constant 0 : index
    %17 = vector.load %arg6[%c0_12, %c0_13] : memref<64x256xf32, #tpu.memory_space<vmem>>, vector<64x256xf32>
    tpu.vector_store %arg6[%c0_12, %c0_13], %16 {strides = array<i32>} : memref<64x256xf32, #tpu.memory_space<vmem>>, vector<64x256xf32>,
    return
  }
  func.func @transform_0(%arg0: i32) -> (i32, i32) {
    %c0_i32 = arith.constant 0 : i32
    %c0_i32_0 = arith.constant 0 : i32
    return %arg0, %c0_i32 : i32, i32
  }
  func.func @transform_1(%arg0: i32) -> (i32, i32) {
    %c0_i32 = arith.constant 0 : i32
    %c0_i32_0 = arith.constant 0 : i32
    %c0_i32_1 = arith.constant 0 : i32
    return %c0_i32, %c0_i32_0 : i32, i32
  }
  func.func @transform_2(%arg0: i32) -> (i32, i32) {
    %c0_i32 = arith.constant 0 : i32
    %c0_i32_0 = arith.constant 0 : i32
    %c0_i32_1 = arith.constant 0 : i32
    return %c0_i32, %c0_i32_0 : i32, i32
  }
  func.func @transform_3(%arg0: i32) -> (i32, i32) {
    %c0_i32 = arith.constant 0 : i32
    %c0_i32_0 = arith.constant 0 : i32
    %c0_i32_1 = arith.constant 0 : i32
    return %c0_i32, %c0_i32_0 : i32, i32
  }
  func.func @transform_4(%arg0: i32) -> (i32, i32) {
    %c0_i32 = arith.constant 0 : i32
    %c0_i32_0 = arith.constant 0 : i32
    %c0_i32_1 = arith.constant 0 : i32
    return %c0_i32, %c0_i32_0 : i32, i32
  }
  func.func @transform_5(%arg0: i32) -> (i32, i32) {
    %c0_i32 = arith.constant 0 : i32
    %c0_i32_0 = arith.constant 0 : i32
    return %arg0, %c0_i32 : i32, i32
  }
}

</mosaic_0001>

<llo_original>
// kernel: tpu_custom_call.1
$region0: #{tpu_custom_call.1}
  #allocation0 [shape = 'u32[]', space=smem, size = 0x4, offset = 0x4, fixed_abs, tag = 'smem constant byte address 0x4 - core index']
  #allocation1 [shape = 'u32[144,128]{1,0:T(1,128)}', space=vmem, size = 0x12000, scoped, tag = 'internal scratch']
  %s0 = inlined_call_operand.hbm [shape: f32[128,256], index: 0, kind: input, shape index: {}]
  %s1 = inlined_call_operand.hbm [shape: bf16[256,512], index: 1, kind: input, shape index: {}]
  %s2 = inlined_call_operand.vmem [shape: f32[1,512], index: 2, kind: input, shape index: {}]
  %s3 = inlined_call_operand.hbm [shape: bf16[512,256], index: 3, kind: input, shape index: {}]
  %s4 = inlined_call_operand.vmem [shape: f32[1,256], index: 4, kind: input, shape index: {}]
  %s5 = inlined_call_operand.hbm [shape: f32[128,256], index: 5, kind: output, shape index: {}]
  %s6 = sld [smem:[#allocation0]]
  $region65: #{tpu_custom_call.1} parent=0
    _
  %s8 = ssub.s32 1, %s6
  %s9 = scalar_select 0, %s8, %s6
  $region1: #{tpu_custom_call.1} parent=0
    #allocation2 [shape = 'u8[131072]{0}', space=vmem, size = 0x20000, scoped, tag = 'input window, operand 0']
    #allocation3 [shape = 's32[2]{0}', space=sflag, size = 0x8, scoped, tag = 'scoped memory for tpu_custom_call.1']
    #allocation4 [shape = 's32[2]{0}', space=sflag, size = 0x8, scoped, tag = 'scoped memory for tpu_custom_call.1']
    #allocation5 [shape = 'u8[262144]{0}', space=vmem, size = 0x40000, scoped, tag = 'input window, operand 1, single buffered']
    #allocation6 [shape = 's32[1]{0}', space=sflag, size = 0x4, scoped, tag = 'scoped memory for tpu_custom_call.1']
    #allocation7 [shape = 'u8[262144]{0}', space=vmem, size = 0x40000, scoped, tag = 'input window, operand 3, single buffered']
    #allocation8 [shape = 'u8[131072]{0}', space=vmem, size = 0x20000, scoped, tag = 'output window, operand 0']
    %10 = vsyncpa [#allocation3], 0
    %s11 = scalar_lea.sflag [#allocation3], 1
    %12 = vsyncpa %s11, 0
    %13 = vsyncpa [#allocation6], 0
    %14 = vsyncpa [#allocation4], 0
    %s15 = scalar_lea.sflag [#allocation4], 1
    %16 = vsyncpa %s15, 0
    loop: start=0, step=1, limit=4
    $region2: #{tpu_custom_call.1} parent=1 // loop_pre_header
      _
    $region3: #{tpu_custom_call.1} parent=1 // loop_header
      %s18 = sphi 0, %s22
      %p19 = scmp.ge.s32.totalorder %s18, 4
      %s28 = sphi 0, %s30
      %s31 = sphi 0, %s28
      %s32 = sphi 0, %s31
      %s48 = sphi 0, %s32
      %s52 = sphi 0, %s52
      %s54 = sphi 0, %s52
      %s55 = sphi 0, %s54
      %s69 = sphi 0, %s55
      %s73 = sphi 0, %s73
      %s75 = sphi 0, %s73
      %s76 = sphi 0, %s75
      %s90 = sphi 0, %s76
      %s94 = sphi 0, %s94
      %s96 = sphi 0, %s94
      %s97 = sphi 0, %s96
      %s111 = sphi 0, %s97
      %s115 = sphi 0, %s115
      %s117 = sphi 0, %s115
      %s118 = sphi 0, %s117
      %s132 = sphi 0, %s118
      %s138 = sphi 0, %s140
      %s141 = sphi 0, %s138
      %s142 = sphi 0, %s141
      %s158 = sphi 0, %s142
    $region4: #{tpu_custom_call.1} parent=1 // loop_header_branch
      %21 = sbr.rel (%p19) target = $region8
    $region5: #{tpu_custom_call.1} parent=1 // loop_body
      %s23 = ssub.s32 %s18, 1
      %s24 = ssub.s32 %s18, 2
      %s25 = sadd.s32 %s18, 1
      %s26 = ssub.s32 %s18, %s25
      %p27 = scmp.eq.s32.totalorder %s26, 0
      %s29 = sadd.s32 %s28, 1
      %s30 = scalar_select %p27, %s28, %s29
      %p33 = pneg %p27
      %p34 = scmp.eq.s32.totalorder %s18, 1
      %p35 = por %p33, %p34
      %p36 = scmp.ne.s32.totalorder %s28, %s31
      %p37 = scmp.eq.s32.totalorder %s18, 0
      %p38 = por %p36, %p37
      %p39 = scmp.ne.s32.totalorder %s28, %s31
      %p40 = scmp.eq.s32.totalorder %s23, 1
      %p41 = por %p39, %p40
      %p42 = scmp.ne.s32.totalorder %s31, %s32
      %p43 = scmp.eq.s32.totalorder %s23, 0
      %p44 = por %p42, %p43
      %p45 = scmp.ne.s32.totalorder %s31, %s32
      %p46 = scmp.eq.s32.totalorder %s24, 1
      %p47 = por %p45, %p46
      %p49 = scmp.ne.s32.totalorder %s32, %s48
      %p50 = scmp.eq.s32.totalorder %s24, 0
      %p51 = por %p49, %p50
      %s53 = sadd.s32 %s52, 1
      %p56 = scmp.eq.s32.totalorder %s18, 1
      %p57 = scmp.ne.s32.totalorder %s52, %s54
      %p58 = scmp.eq.s32.totalorder %s18, 0
      %p59 = por %p57, %p58
      %p60 = scmp.ne.s32.totalorder %s52, %s54
      %p61 = scmp.eq.s32.totalorder %s23, 1
      %p62 = por %p60, %p61
      %p63 = scmp.ne.s32.totalorder %s54, %s55
      %p64 = scmp.eq.s32.totalorder %s23, 0
      %p65 = por %p63, %p64
      %p66 = scmp.ne.s32.totalorder %s54, %s55
      %p67 = scmp.eq.s32.totalorder %s24, 1
      %p68 = por %p66, %p67
      %p70 = scmp.ne.s32.totalorder %s55, %s69
      %p71 = scmp.eq.s32.totalorder %s24, 0
      %p72 = por %p70, %p71
      %s74 = sadd.s32 %s73, 1
      %p77 = scmp.eq.s32.totalorder %s18, 1
      %p78 = scmp.ne.s32.totalorder %s73, %s75
      %p79 = scmp.eq.s32.totalorder %s18, 0
      %p80 = por %p78, %p79
      %p81 = scmp.ne.s32.totalorder %s73, %s75
      %p82 = scmp.eq.s32.totalorder %s23, 1
      %p83 = por %p81, %p82
      %p84 = scmp.ne.s32.totalorder %s75, %s76
      %p85 = scmp.eq.s32.totalorder %s23, 0
      %p86 = por %p84, %p85
      %p87 = scmp.ne.s32.totalorder %s75, %s76
      %p88 = scmp.eq.s32.totalorder %s24, 1
      %p89 = por %p87, %p88
      %p91 = scmp.ne.s32.totalorder %s76, %s90
      %p92 = scmp.eq.s32.totalorder %s24, 0
      %p93 = por %p91, %p92
      %s95 = sadd.s32 %s94, 1
      %p98 = scmp.eq.s32.totalorder %s18, 1
      %p99 = scmp.ne.s32.totalorder %s94, %s96
      %p100 = scmp.eq.s32.totalorder %s18, 0
      %p101 = por %p99, %p100
      %p102 = scmp.ne.s32.totalorder %s94, %s96
      %p103 = scmp.eq.s32.totalorder %s23, 1
      %p104 = por %p102, %p103
      %p105 = scmp.ne.s32.totalorder %s96, %s97
      %p106 = scmp.eq.s32.totalorder %s23, 0
      %p107 = por %p105, %p106
      %p108 = scmp.ne.s32.totalorder %s96, %s97
      %p109 = scmp.eq.s32.totalorder %s24, 1
      %p110 = por %p108, %p109
      %p112 = scmp.ne.s32.totalorder %s97, %s111
      %p113 = scmp.eq.s32.totalorder %s24, 0
      %p114 = por %p112, %p113
      %s116 = sadd.s32 %s115, 1
      %p119 = scmp.eq.s32.totalorder %s18, 1
      %p120 = scmp.ne.s32.totalorder %s115, %s117
      %p121 = scmp.eq.s32.totalorder %s18, 0
      %p122 = por %p120, %p121
      %p123 = scmp.ne.s32.totalorder %s115, %s117
      %p124 = scmp.eq.s32.totalorder %s23, 1
      %p125 = por %p123, %p124
      %p126 = scmp.ne.s32.totalorder %s117, %s118
      %p127 = scmp.eq.s32.totalorder %s23, 0
      %p128 = por %p126, %p127
      %p129 = scmp.ne.s32.totalorder %s117, %s118
      %p130 = scmp.eq.s32.totalorder %s24, 1
      %p131 = por %p129, %p130
      %p133 = scmp.ne.s32.totalorder %s118, %s132
      %p134 = scmp.eq.s32.totalorder %s24, 0
      %p135 = por %p133, %p134
      %s136 = ssub.s32 %s18, %s25
      %p137 = scmp.eq.s32.totalorder %s136, 0
      %s139 = sadd.s32 %s138, 1
      %s140 = scalar_select %p137, %s138, %s139
      %p143 = pneg %p137
      %p144 = scmp.eq.s32.totalorder %s18, 1
      %p145 = por %p143, %p144
      %p146 = scmp.ne.s32.totalorder %s138, %s141
      %p147 = scmp.eq.s32.totalorder %s18, 0
      %p148 = por %p146, %p147
      %p149 = scmp.ne.s32.totalorder %s138, %s141
      %p150 = scmp.eq.s32.totalorder %s23, 1
      %p151 = por %p149, %p150
      %p152 = scmp.ne.s32.totalorder %s141, %s142
      %p153 = scmp.eq.s32.totalorder %s23, 0
      %p154 = por %p152, %p153
      %p155 = scmp.ne.s32.totalorder %s141, %s142
      %p156 = scmp.eq.s32.totalorder %s24, 1
      %p157 = por %p155, %p156
      %p159 = scmp.ne.s32.totalorder %s142, %s158
      %p160 = scmp.eq.s32.totalorder %s24, 0
      %p161 = por %p159, %p160
      %p162 = scmp.le.s32.totalorder 1, %s18
      %p163 = scmp.lt.s32.totalorder %s18, 3
      %p164 = pnand %p162, %p163
      %p165 = pneg %p164
      // Predicated region
      $region9: #{tpu_custom_call.1} parent=5 // pred_check
        _
      $region10: #{tpu_custom_call.1} parent=5 // pred_check_branch
        %167 = sbr.rel (%p164) target = $region12
      $region11: #{tpu_custom_call.1} parent=5 // pred_region
        %s168 = ssub.s32 %s18, 1
        // Predicated region
        $region13: #{tpu_custom_call.1} parent=11 // pred_check
          %p169 = pneg %p65
        $region14: #{tpu_custom_call.1} parent=11 // pred_check_branch
          %171 = sbr.rel (%p169) target = $region16
        $region15: #{tpu_custom_call.1} parent=11 // pred_region
          %s173 = ssub.s32 8192, 8192
          %174 = vsyncadd [#allocation6], %s173
          %s175 = sshll.u32 [#allocation5], 4
          %s176 = int_to_ptr.vmem [resolvable:$true] %s175
          %181 = dma.hbm_to_vmem [thread:$0]  %s1, 8192, %s176, [#allocation6], 256, 256, 16
        $region16: #{tpu_custom_call.1} parent=11 // pred_fallthru
          _
        // Predicated region
        $region17: #{tpu_custom_call.1} parent=11 // pred_check
          %p182 = pneg %p86
        $region18: #{tpu_custom_call.1} parent=11 // pred_check_branch
          %184 = sbr.rel (%p182) target = $region20
        $region19: #{tpu_custom_call.1} parent=11 // pred_region
          _
        $region20: #{tpu_custom_call.1} parent=11 // pred_fallthru
          _
        // Predicated region
        $region21: #{tpu_custom_call.1} parent=11 // pred_check
          %p185 = pneg %p107
        $region22: #{tpu_custom_call.1} parent=11 // pred_check_branch
          %187 = sbr.rel (%p185) target = $region24
        $region23: #{tpu_custom_call.1} parent=11 // pred_region
          %s189 = ssub.s32 8192, 8192
          %190 = vsyncadd [#allocation6], %s189
          %s191 = sshll.u32 [#allocation7], 4
          %s192 = int_to_ptr.vmem [resolvable:$true] %s191
          %197 = dma.hbm_to_vmem [thread:$0]  %s3, 8192, %s192, [#allocation6], 128, 128, 8
        $region24: #{tpu_custom_call.1} parent=11 // pred_fallthru
          _
        // Predicated region
        $region25: #{tpu_custom_call.1} parent=11 // pred_check
          %p198 = pneg %p128
        $region26: #{tpu_custom_call.1} parent=11 // pred_check_branch
          %200 = sbr.rel (%p198) target = $region28
        $region27: #{tpu_custom_call.1} parent=11 // pred_region
          _
        $region28: #{tpu_custom_call.1} parent=11 // pred_fallthru
          _
      $region12: #{tpu_custom_call.1} parent=5 // pred_fallthru
        _
      %p201 = scmp.lt.s32.totalorder %s18, 2
      // Predicated region
      $region29: #{tpu_custom_call.1} parent=5 // pred_check
        %p202 = pneg %p201
      $region30: #{tpu_custom_call.1} parent=5 // pred_check_branch
        %204 = sbr.rel (%p202) target = $region32
      $region31: #{tpu_custom_call.1} parent=5 // pred_region
        // Predicated region
        $region33: #{tpu_custom_call.1} parent=31 // pred_check
          %p205 = pneg %p38
        $region34: #{tpu_custom_call.1} parent=31 // pred_check_branch
          %207 = sbr.rel (%p205) target = $region36
        $region35: #{tpu_custom_call.1} parent=31 // pred_region
          %s208 = sand.u32 %s28, 1
          %s209 = scalar_lea.sflag [#allocation3], %s208
          %s210 = sand.u32 %s28, 1
          %s211 = smul.addr %s210, 128
          %s212 = scalar_lea.vmem [#allocation2], %s211
          %s213 = smul.u32 8, %s18
          %s215 = ssub.s32 2048, 2048
          %216 = vsyncadd %s209, %s215
          %s217 = smul.addr %s213, 2
          %s218 = smul.addr %s217, 128
          %s219 = scalar_lea.hbm %s0, %s218
          %s220 = sshll.u32 %s212, 4
          %s221 = int_to_ptr.vmem [resolvable:$true] %s220
          %226 = dma.hbm_to_vmem [thread:$0]  %s219, 2048, %s221, %s209, 256, 256, 16
        $region36: #{tpu_custom_call.1} parent=31 // pred_fallthru
          _
      $region32: #{tpu_custom_call.1} parent=5 // pred_fallthru
        _
      %p227 = scmp.le.s32.totalorder 1, %s18
      %p228 = scmp.lt.s32.totalorder %s18, 3
      %p229 = pnand %p227, %p228
      %p230 = pneg %p229
      // Predicated region
      $region37: #{tpu_custom_call.1} parent=5 // pred_check
        _
      $region38: #{tpu_custom_call.1} parent=5 // pred_check_branch
        %232 = sbr.rel (%p229) target = $region40
      $region39: #{tpu_custom_call.1} parent=5 // pred_region
        %s233 = ssub.s32 %s18, 1
        %s234 = sand.u32 %s31, 1
        %s235 = scalar_lea.sflag [#allocation3], %s234
        %s236 = sand.u32 %s31, 1
        %s237 = smul.addr %s236, 128
        %s238 = scalar_lea.vmem [#allocation2], %s237
        // Predicated region
        $region41: #{tpu_custom_call.1} parent=39 // pred_check
          %p239 = pneg %p44
        $region42: #{tpu_custom_call.1} parent=39 // pred_check_branch
          %241 = sbr.rel (%p239) target = $region44
        $region43: #{tpu_custom_call.1} parent=39 // pred_region
          %242 = dma.done %s235, 2048
        $region44: #{tpu_custom_call.1} parent=39 // pred_fallthru
          _
        // Predicated region
        $region45: #{tpu_custom_call.1} parent=39 // pred_check
          %p243 = pneg %p65
        $region46: #{tpu_custom_call.1} parent=39 // pred_check_branch
          %245 = sbr.rel (%p243) target = $region48
        $region47: #{tpu_custom_call.1} parent=39 // pred_region
          %246 = dma.done [#allocation6], 8192
        $region48: #{tpu_custom_call.1} parent=39 // pred_fallthru
          _
        // Predicated region
        $region49: #{tpu_custom_call.1} parent=39 // pred_check
          %p247 = pneg %p107
        $region50: #{tpu_custom_call.1} parent=39 // pred_check_branch
          %249 = sbr.rel (%p247) target = $region52
        $region51: #{tpu_custom_call.1} parent=39 // pred_region
          %250 = dma.done [#allocation6], 8192
        $region52: #{tpu_custom_call.1} parent=39 // pred_fallthru
          _
        %s251 = sand.u32 %s31, 1
        %s252 = scalar_lea.sflag [#allocation3], %s251
        %s253 = sand.u32 %s31, 1
        %s254 = smul.addr %s253, 128
        %s255 = scalar_lea.vmem [#allocation2], %s254
        %p256 = pneg %p44
        %p257 = pneg %p41
        %p258 = pneg %p65
        %p259 = pneg %p62
        %p260 = pneg %p86
        %p261 = pneg %p83
        %p262 = pneg %p107
        %p263 = pneg %p104
        %p264 = pneg %p128
        %p265 = pneg %p125
        %p266 = pneg %p154
        %p267 = pneg %p151
        %s268 = sand.u32 %s141, 1
        %s269 = scalar_lea.sflag [#allocation4], %s268
        %s270 = sand.u32 %s141, 1
        %s271 = smul.addr %s270, 128
        %s272 = scalar_lea.vmem [#allocation8], %s271
        %s273 = smul.u32 8, %s23
        %s274 = smul.u32 8, %s23
        %v275 = vld [vmem:[%s238] sm:$0xff]
        %v276 = vld [vmem:[%s238 + $0x8] sm:$0xff]
        %v277 = vld [vmem:[%s238 + $0x10] sm:$0xff]
        %v278 = vld [vmem:[%s238 + $0x18] sm:$0xff]
        %v279 = vld [vmem:[%s238 + $0x20] sm:$0xff]
        %v280 = vld [vmem:[%s238 + $0x28] sm:$0xff]
        %v281 = vld [vmem:[%s238 + $0x30] sm:$0xff]
        %v282 = vld [vmem:[%s238 + $0x38] sm:$0xff]
        %v283 = vld [vmem:[%s238 + $0x40] sm:$0xff]
        %v284 = vld [vmem:[%s238 + $0x48] sm:$0xff]
        %v285 = vld [vmem:[%s238 + $0x50] sm:$0xff]
        %v286 = vld [vmem:[%s238 + $0x58] sm:$0xff]
        %v287 = vld [vmem:[%s238 + $0x60] sm:$0xff]
        %v288 = vld [vmem:[%s238 + $0x68] sm:$0xff]
        %v289 = vld [vmem:[%s238 + $0x70] sm:$0xff]
        %v290 = vld [vmem:[%s238 + $0x78] sm:$0xff]
        %v291 = vpack.c.bf16 %v277, %v275
        %v292 = vpack.c.bf16 %v278, %v276
        %v293 = vpack.c.bf16 %v281, %v279
        %v294 = vpack.c.bf16 %v282, %v280
        %v295 = vpack.c.bf16 %v285, %v283
        %v296 = vpack.c.bf16 %v286, %v284
        %v297 = vpack.c.bf16 %v289, %v287
        %v298 = vpack.c.bf16 %v290, %v288
        %v299 = vld [vmem:[#allocation5] sm:$0xff]
        %v300 = vld [vmem:[#allocation5 + $0x8] sm:$0xff]
        %v301 = vld [vmem:[#allocation5 + $0x10] sm:$0xff]
        %v302 = vld [vmem:[#allocation5 + $0x18] sm:$0xff]
        %v303 = vld [vmem:[#allocation5 + $0x20] sm:$0xff]
        %v304 = vld [vmem:[#allocation5 + $0x28] sm:$0xff]
        %v305 = vld [vmem:[#allocation5 + $0x30] sm:$0xff]
        %v306 = vld [vmem:[#allocation5 + $0x38] sm:$0xff]
        %v307 = vld [vmem:[#allocation5 + $0x40] sm:$0xff]
        %v308 = vld [vmem:[#allocation5 + $0x48] sm:$0xff]
        %v309 = vld [vmem:[#allocation5 + $0x50] sm:$0xff]
        %v310 = vld [vmem:[#allocation5 + $0x58] sm:$0xff]
        %v311 = vld [vmem:[#allocation5 + $0x60] sm:$0xff]
        %v312 = vld [vmem:[#allocation5 + $0x68] sm:$0xff]
        %v313 = vld [vmem:[#allocation5 + $0x70] sm:$0xff]
        %v314 = vld [vmem:[#allocation5 + $0x78] sm:$0xff]
        %v315 = vld [vmem:[#allocation5 + $0x80] sm:$0xff]
        %v316 = vld [vmem:[#allocation5 + $0x88] sm:$0xff]
        %v317 = vld [vmem:[#allocation5 + $0x90] sm:$0xff]
        %v318 = vld [vmem:[#allocation5 + $0x98] sm:$0xff]
        %v319 = vld [vmem:[#allocation5 + $0xa0] sm:$0xff]
        %v320 = vld [vmem:[#allocation5 + $0xa8] sm:$0xff]
        %v321 = vld [vmem:[#allocation5 + $0xb0] sm:$0xff]
        %v322 = vld [vmem:[#allocation5 + $0xb8] sm:$0xff]
        %v323 = vld [vmem:[#allocation5 + $0xc0] sm:$0xff]
        %v324 = vld [vmem:[#allocation5 + $0xc8] sm:$0xff]
        %v325 = vld [vmem:[#allocation5 + $0xd0] sm:$0xff]
        %v326 = vld [vmem:[#allocation5 + $0xd8] sm:$0xff]
        %v327 = vld [vmem:[#allocation5 + $0xe0] sm:$0xff]
        %v328 = vld [vmem:[#allocation5 + $0xe8] sm:$0xff]
        %v329 = vld [vmem:[#allocation5 + $0xf0] sm:$0xff]
        %v330 = vld [vmem:[#allocation5 + $0xf8] sm:$0xff]
        %v331 = vld [vmem:[#allocation5 + $0x100] sm:$0xff]
        %v332 = vld [vmem:[#allocation5 + $0x108] sm:$0xff]
        %v333 = vld [vmem:[#allocation5 + $0x110] sm:$0xff]
        %v334 = vld [vmem:[#allocation5 + $0x118] sm:$0xff]
        %v335 = vld [vmem:[#allocation5 + $0x120] sm:$0xff]
        %v336 = vld [vmem:[#allocation5 + $0x128] sm:$0xff]
        %v337 = vld [vmem:[#allocation5 + $0x130] sm:$0xff]
        %v338 = vld [vmem:[#allocation5 + $0x138] sm:$0xff]
        %v339 = vld [vmem:[#allocation5 + $0x140] sm:$0xff]
        %v340 = vld [vmem:[#allocation5 + $0x148] sm:$0xff]
        %v341 = vld [vmem:[#allocation5 + $0x150] sm:$0xff]
        %v342 = vld [vmem:[#allocation5 + $0x158] sm:$0xff]
        %v343 = vld [vmem:[#allocation5 + $0x160] sm:$0xff]
        %v344 = vld [vmem:[#allocation5 + $0x168] sm:$0xff]
        %v345 = vld [vmem:[#allocation5 + $0x170] sm:$0xff]
        %v346 = vld [vmem:[#allocation5 + $0x178] sm:$0xff]
        %v347 = vld [vmem:[#allocation5 + $0x180] sm:$0xff]
        %v348 = vld [vmem:[#allocation5 + $0x188] sm:$0xff]
        %v349 = vld [vmem:[#allocation5 + $0x190] sm:$0xff]
        %v350 = vld [vmem:[#allocation5 + $0x198] sm:$0xff]
        %v351 = vld [vmem:[#allocation5 + $0x1a0] sm:$0xff]
        %v352 = vld [vmem:[#allocation5 + $0x1a8] sm:$0xff]
        %v353 = vld [vmem:[#allocation5 + $0x1b0] sm:$0xff]
        %v354 = vld [vmem:[#allocation5 + $0x1b8] sm:$0xff]
        %v355 = vld [vmem:[#allocation5 + $0x1c0] sm:$0xff]
        %v356 = vld [vmem:[#allocation5 + $0x1c8] sm:$0xff]
        %v357 = vld [vmem:[#allocation5 + $0x1d0] sm:$0xff]
        %v358 = vld [vmem:[#allocation5 + $0x1d8] sm:$0xff]
        %v359 = vld [vmem:[#allocation5 + $0x1e0] sm:$0xff]
        %v360 = vld [vmem:[#allocation5 + $0x1e8] sm:$0xff]
        %v361 = vld [vmem:[#allocation5 + $0x1f0] sm:$0xff]
        %v362 = vld [vmem:[#allocation5 + $0x1f8] sm:$0xff]
        %v363 = vld [vmem:[%s2] sm:$0xf]
        %v365 = vlaneseq
        %v366 = vshrl.u32 %v365, 7
        %v367 = vsub.s32 0, %v366
        %v368 = vrot.slane %v363, %v367
        %v369 = vlaneseq
        %v370 = vshrl.u32 %v369, 7
        %v371 = vsub.s32 1, %v370
        %v372 = vrot.slane %v363, %v371
        %v373 = vlaneseq
        %v374 = vshrl.u32 %v373, 7
        %v375 = vsub.s32 2, %v374
        %v376 = vrot.slane %v363, %v375
        %v377 = vlaneseq
        %v378 = vshrl.u32 %v377, 7
        %v379 = vsub.s32 3, %v378
        %v380 = vrot.slane %v363, %v379
        %v449 = vunpack.c.l.b16 %v299
        %v450 = vunpack.c.h.b16 %v299
        %v451 = vunpack.c.l.b16 %v300
        %v452 = vunpack.c.h.b16 %v300
        %v453 = vunpack.c.l.b16 %v301
        %v454 = vunpack.c.h.b16 %v301
        %v455 = vunpack.c.l.b16 %v302
        %v456 = vunpack.c.h.b16 %v302
        %v457 = vunpack.c.l.b16 %v303
        %v458 = vunpack.c.h.b16 %v303
        %v459 = vunpack.c.l.b16 %v304
        %v460 = vunpack.c.h.b16 %v304
        %v461 = vunpack.c.l.b16 %v305
        %v462 = vunpack.c.h.b16 %v305
        %v463 = vunpack.c.l.b16 %v306
        %v464 = vunpack.c.h.b16 %v306
        %v465 = vunpack.c.l.b16 %v307
        %v466 = vunpack.c.h.b16 %v307
        %v467 = vunpack.c.l.b16 %v308
        %v468 = vunpack.c.h.b16 %v308
        %v469 = vunpack.c.l.b16 %v309
        %v470 = vunpack.c.h.b16 %v309
        %v471 = vunpack.c.l.b16 %v310
        %v472 = vunpack.c.h.b16 %v310
        %v473 = vunpack.c.l.b16 %v311
        %v474 = vunpack.c.h.b16 %v311
        %v475 = vunpack.c.l.b16 %v312
        %v476 = vunpack.c.h.b16 %v312
        %v477 = vunpack.c.l.b16 %v313
        %v478 = vunpack.c.h.b16 %v313
        %v479 = vunpack.c.l.b16 %v314
        %v480 = vunpack.c.h.b16 %v314
        %v481 = vunpack.c.l.b16 %v315
        %v482 = vunpack.c.h.b16 %v315
        %v483 = vunpack.c.l.b16 %v316
        %v484 = vunpack.c.h.b16 %v316
        %v485 = vunpack.c.l.b16 %v317
        %v486 = vunpack.c.h.b16 %v317
        %v487 = vunpack.c.l.b16 %v318
        %v488 = vunpack.c.h.b16 %v318
        %v489 = vunpack.c.l.b16 %v319
        %v490 = vunpack.c.h.b16 %v319
        %v491 = vunpack.c.l.b16 %v320
        %v492 = vunpack.c.h.b16 %v320
        %v493 = vunpack.c.l.b16 %v321
        %v494 = vunpack.c.h.b16 %v321
        %v495 = vunpack.c.l.b16 %v322
        %v496 = vunpack.c.h.b16 %v322
        %v497 = vunpack.c.l.b16 %v323
        %v498 = vunpack.c.h.b16 %v323
        %v499 = vunpack.c.l.b16 %v324
        %v500 = vunpack.c.h.b16 %v324
        %v501 = vunpack.c.l.b16 %v325
        %v502 = vunpack.c.h.b16 %v325
        %v503 = vunpack.c.l.b16 %v326
        %v504 = vunpack.c.h.b16 %v326
        %v505 = vunpack.c.l.b16 %v327
        %v506 = vunpack.c.h.b16 %v327
        %v507 = vunpack.c.l.b16 %v328
        %v508 = vunpack.c.h.b16 %v328
        %v509 = vunpack.c.l.b16 %v329
        %v510 = vunpack.c.h.b16 %v329
        %v511 = vunpack.c.l.b16 %v330
        %v512 = vunpack.c.h.b16 %v330
        %v513 = vunpack.c.l.b16 %v331
        %v514 = vunpack.c.h.b16 %v331
        %v515 = vunpack.c.l.b16 %v332
        %v516 = vunpack.c.h.b16 %v332
        %v517 = vunpack.c.l.b16 %v333
        %v518 = vunpack.c.h.b16 %v333
        %v519 = vunpack.c.l.b16 %v334
        %v520 = vunpack.c.h.b16 %v334
        %v521 = vunpack.c.l.b16 %v335
        %v522 = vunpack.c.h.b16 %v335
        %v523 = vunpack.c.l.b16 %v336
        %v524 = vunpack.c.h.b16 %v336
        %v525 = vunpack.c.l.b16 %v337
        %v526 = vunpack.c.h.b16 %v337
        %v527 = vunpack.c.l.b16 %v338
        %v528 = vunpack.c.h.b16 %v338
        %v529 = vunpack.c.l.b16 %v339
        %v530 = vunpack.c.h.b16 %v339
        %v531 = vunpack.c.l.b16 %v340
        %v532 = vunpack.c.h.b16 %v340
        %v533 = vunpack.c.l.b16 %v341
        %v534 = vunpack.c.h.b16 %v341
        %v535 = vunpack.c.l.b16 %v342
        %v536 = vunpack.c.h.b16 %v342
        %v537 = vunpack.c.l.b16 %v343
        %v538 = vunpack.c.h.b16 %v343
        %v539 = vunpack.c.l.b16 %v344
        %v540 = vunpack.c.h.b16 %v344
        %v541 = vunpack.c.l.b16 %v345
        %v542 = vunpack.c.h.b16 %v345
        %v543 = vunpack.c.l.b16 %v346
        %v544 = vunpack.c.h.b16 %v346
        %v545 = vunpack.c.l.b16 %v347
        %v546 = vunpack.c.h.b16 %v347
        %v547 = vunpack.c.l.b16 %v348
        %v548 = vunpack.c.h.b16 %v348
        %v549 = vunpack.c.l.b16 %v349
        %v550 = vunpack.c.h.b16 %v349
        %v551 = vunpack.c.l.b16 %v350
        %v552 = vunpack.c.h.b16 %v350
        %v553 = vunpack.c.l.b16 %v351
        %v554 = vunpack.c.h.b16 %v351
        %v555 = vunpack.c.l.b16 %v352
        %v556 = vunpack.c.h.b16 %v352
        %v557 = vunpack.c.l.b16 %v353
        %v558 = vunpack.c.h.b16 %v353
        %v559 = vunpack.c.l.b16 %v354
        %v560 = vunpack.c.h.b16 %v354
        %v561 = vunpack.c.l.b16 %v355
        %v562 = vunpack.c.h.b16 %v355
        %v563 = vunpack.c.l.b16 %v356
        %v564 = vunpack.c.h.b16 %v356
        %v565 = vunpack.c.l.b16 %v357
        %v566 = vunpack.c.h.b16 %v357
        %v567 = vunpack.c.l.b16 %v358
        %v568 = vunpack.c.h.b16 %v358
        %v569 = vunpack.c.l.b16 %v359
        %v570 = vunpack.c.h.b16 %v359
        %v571 = vunpack.c.l.b16 %v360
        %v572 = vunpack.c.h.b16 %v360
        %v573 = vunpack.c.l.b16 %v361
        %v574 = vunpack.c.h.b16 %v361
        %v575 = vunpack.c.l.b16 %v362
        %v576 = vunpack.c.h.b16 %v362
        %v577 = vpack.c.b16 %v453, %v449
        %v578 = vpack.c.b16 %v454, %v450
        %v579 = vpack.c.b16 %v455, %v451
        %v580 = vpack.c.b16 %v456, %v452
        %v581 = vpack.c.b16 %v461, %v457
        %v582 = vpack.c.b16 %v462, %v458
        %v583 = vpack.c.b16 %v463, %v459
        %v584 = vpack.c.b16 %v464, %v460
        %v585 = vpack.c.b16 %v469, %v465
        %v586 = vpack.c.b16 %v470, %v466
        %v587 = vpack.c.b16 %v471, %v467
        %v588 = vpack.c.b16 %v472, %v468
        %v589 = vpack.c.b16 %v477, %v473
        %v590 = vpack.c.b16 %v478, %v474
        %v591 = vpack.c.b16 %v479, %v475
        %v592 = vpack.c.b16 %v480, %v476
        %v593 = vpack.c.b16 %v485, %v481
        %v594 = vpack.c.b16 %v486, %v482
        %v595 = vpack.c.b16 %v487, %v483
        %v596 = vpack.c.b16 %v488, %v484
        %v597 = vpack.c.b16 %v493, %v489
        %v598 = vpack.c.b16 %v494, %v490
        %v599 = vpack.c.b16 %v495, %v491
        %v600 = vpack.c.b16 %v496, %v492
        %v601 = vpack.c.b16 %v501, %v497
        %v602 = vpack.c.b16 %v502, %v498
        %v603 = vpack.c.b16 %v503, %v499
        %v604 = vpack.c.b16 %v504, %v500
        %v605 = vpack.c.b16 %v509, %v505
        %v606 = vpack.c.b16 %v510, %v506
        %v607 = vpack.c.b16 %v511, %v507
        %v608 = vpack.c.b16 %v512, %v508
        %v609 = vpack.c.b16 %v517, %v513
        %v610 = vpack.c.b16 %v518, %v514
        %v611 = vpack.c.b16 %v519, %v515
        %v612 = vpack.c.b16 %v520, %v516
        %v613 = vpack.c.b16 %v525, %v521
        %v614 = vpack.c.b16 %v526, %v522
        %v615 = vpack.c.b16 %v527, %v523
        %v616 = vpack.c.b16 %v528, %v524
        %v617 = vpack.c.b16 %v533, %v529
        %v618 = vpack.c.b16 %v534, %v530
        %v619 = vpack.c.b16 %v535, %v531
        %v620 = vpack.c.b16 %v536, %v532
        %v621 = vpack.c.b16 %v541, %v537
        %v622 = vpack.c.b16 %v542, %v538
        %v623 = vpack.c.b16 %v543, %v539
        %v624 = vpack.c.b16 %v544, %v540
        %v625 = vpack.c.b16 %v549, %v545
        %v626 = vpack.c.b16 %v550, %v546
        %v627 = vpack.c.b16 %v551, %v547
        %v628 = vpack.c.b16 %v552, %v548
        %v629 = vpack.c.b16 %v557, %v553
        %v630 = vpack.c.b16 %v558, %v554
        %v631 = vpack.c.b16 %v559, %v555
        %v632 = vpack.c.b16 %v560, %v556
        %v633 = vpack.c.b16 %v565, %v561
        %v634 = vpack.c.b16 %v566, %v562
        %v635 = vpack.c.b16 %v567, %v563
        %v636 = vpack.c.b16 %v568, %v564
        %v637 = vpack.c.b16 %v573, %v569
        %v638 = vpack.c.b16 %v574, %v570
        %v639 = vpack.c.b16 %v575, %v571
        %v640 = vpack.c.b16 %v576, %v572
        %705 = vmatprep.subr.bf16.mxu0 %v578
        %706 = vmatpush1.bf16.msra.mxu0 %v577
        %707 = vmatprep.subr.bf16.mxu0 %v582
        %708 = vmatpush1.bf16.msra.mxu0 %v581
        %709 = vmatprep.subr.bf16.mxu0 %v586
        %710 = vmatpush1.bf16.msra.mxu0 %v585
        %711 = vmatprep.subr.bf16.mxu0 %v590
        %712 = vmatpush1.bf16.msra.mxu0 %v589
        %713 = vmatprep.subr.bf16.mxu0 %v594
        %714 = vmatpush1.bf16.msra.mxu0 %v593
        %715 = vmatprep.subr.bf16.mxu0 %v598
        %716 = vmatpush1.bf16.msra.mxu0 %v597
        %717 = vmatprep.subr.bf16.mxu0 %v602
        %718 = vmatpush1.bf16.msra.mxu0 %v601
        %719 = vmatprep.subr.bf16.mxu0 %v606
        %720 = vmatpush1.bf16.msra.mxu0 %v605
        %721 = vmatprep.subr.bf16.mxu0 %v610
        %722 = vmatpush1.bf16.msra.mxu0 %v609
        %723 = vmatprep.subr.bf16.mxu0 %v614
        %724 = vmatpush1.bf16.msra.mxu0 %v613
        %725 = vmatprep.subr.bf16.mxu0 %v618
        %726 = vmatpush1.bf16.msra.mxu0 %v617
        %727 = vmatprep.subr.bf16.mxu0 %v622
        %728 = vmatpush1.bf16.msra.mxu0 %v621
        %729 = vmatprep.subr.bf16.mxu0 %v626
        %730 = vmatpush1.bf16.msra.mxu0 %v625
        %731 = vmatprep.subr.bf16.mxu0 %v630
        %732 = vmatpush1.bf16.msra.mxu0 %v629
        %733 = vmatprep.subr.bf16.mxu0 %v634
        %734 = vmatpush1.bf16.msra.mxu0 %v633
        %735 = vmatprep.subr.bf16.mxu0 %v638
        %736 = vmatpush1.bf16.msra.mxu0 %v637
        %737 = vmatprep.mubr.bf16.mxu0 %v292
        %738 = vmatmul.mubr.bf16.gmra.mrb[0].mxu0 %v291
        %v739 = vpop.f32.mrb[0].mxu0
        %v740 = vadd.f32 %v368, %v739
        %v741 = vpop.f32.mrb[0].mxu0
        %v742 = vadd.f32 %v372, %v741
        %v743 = vpop.f32.mrb[0].mxu0
        %v744 = vadd.f32 %v368, %v743
        %v745 = vpop.f32.mrb[0].mxu0
        %v746 = vadd.f32 %v372, %v745
        %747 = vmatprep.mubr.bf16.mxu0 %v294
        %748 = vmatmul.mubr.bf16.gmra.mrb[0].mxu0 %v293
        %v749 = vpop.f32.mrb[0].mxu0
        %v750 = vadd.f32 %v368, %v749
        %v751 = vpop.f32.mrb[0].mxu0
        %v752 = vadd.f32 %v372, %v751
        %v753 = vpop.f32.mrb[0].mxu0
        %v754 = vadd.f32 %v368, %v753
        %v755 = vpop.f32.mrb[0].mxu0
        %v756 = vadd.f32 %v372, %v755
        %757 = vmatprep.mubr.bf16.mxu0 %v296
        %758 = vmatmul.mubr.bf16.gmra.mrb[0].mxu0 %v295
        %v759 = vpop.f32.mrb[0].mxu0
        %v760 = vadd.f32 %v368, %v759
        %v761 = vpop.f32.mrb[0].mxu0
        %v762 = vadd.f32 %v372, %v761
        %v763 = vpop.f32.mrb[0].mxu0
        %v764 = vadd.f32 %v368, %v763
        %v765 = vpop.f32.mrb[0].mxu0
        %v766 = vadd.f32 %v372, %v765
        %767 = vmatprep.mubr.bf16.mxu0 %v298
        %768 = vmatmul.mubr.bf16.gmra.mrb[0].mxu0 %v297
        %v769 = vpop.f32.mrb[0].mxu0
        %v770 = vadd.f32 %v368, %v769
        %v771 = vpop.f32.mrb[0].mxu0
        %v772 = vadd.f32 %v372, %v771
        %v773 = vpop.f32.mrb[0].mxu0
        %v774 = vadd.f32 %v368, %v773
        %v775 = vpop.f32.mrb[0].mxu0
        %v776 = vadd.f32 %v372, %v775
        %777 = vdwg.mxu0
        %778 = vmatprep.subr.bf16.mxu0 %v580
        %779 = vmatpush1.bf16.msra.mxu0 %v579
        %780 = vmatprep.subr.bf16.mxu0 %v584
        %781 = vmatpush1.bf16.msra.mxu0 %v583
        %782 = vmatprep.subr.bf16.mxu0 %v588
        %783 = vmatpush1.bf16.msra.mxu0 %v587
        %784 = vmatprep.subr.bf16.mxu0 %v592
        %785 = vmatpush1.bf16.msra.mxu0 %v591
        %786 = vmatprep.subr.bf16.mxu0 %v596
        %787 = vmatpush1.bf16.msra.mxu0 %v595
        %788 = vmatprep.subr.bf16.mxu0 %v600
        %789 = vmatpush1.bf16.msra.mxu0 %v599
        %790 = vmatprep.subr.bf16.mxu0 %v604
        %791 = vmatpush1.bf16.msra.mxu0 %v603
        %792 = vmatprep.subr.bf16.mxu0 %v608
        %793 = vmatpush1.bf16.msra.mxu0 %v607
        %794 = vmatprep.subr.bf16.mxu0 %v612
        %795 = vmatpush1.bf16.msra.mxu0 %v611
        %796 = vmatprep.subr.bf16.mxu0 %v616
        %797 = vmatpush1.bf16.msra.mxu0 %v615
        %798 = vmatprep.subr.bf16.mxu0 %v620
        %799 = vmatpush1.bf16.msra.mxu0 %v619
        %800 = vmatprep.subr.bf16.mxu0 %v624
        %801 = vmatpush1.bf16.msra.mxu0 %v623
        %802 = vmatprep.subr.bf16.mxu0 %v628
        %803 = vmatpush1.bf16.msra.mxu0 %v627
        %804 = vmatprep.subr.bf16.mxu0 %v632
        %805 = vmatpush1.bf16.msra.mxu0 %v631
        %806 = vmatprep.subr.bf16.mxu0 %v636
        %807 = vmatpush1.bf16.msra.mxu0 %v635
        %808 = vmatprep.subr.bf16.mxu0 %v640
        %809 = vmatpush1.bf16.msra.mxu0 %v639
        %810 = vmatprep.mubr.bf16.mxu0 %v292
        %811 = vmatmul.mubr.bf16.gmra.mrb[0].mxu0 %v291
        %v812 = vpop.f32.mrb[0].mxu0
        %v813 = vadd.f32 %v376, %v812
        %v814 = vpop.f32.mrb[0].mxu0
        %v815 = vadd.f32 %v380, %v814
        %v816 = vpop.f32.mrb[0].mxu0
        %v817 = vadd.f32 %v376, %v816
        %v818 = vpop.f32.mrb[0].mxu0
        %v819 = vadd.f32 %v380, %v818
        %820 = vmatprep.mubr.bf16.mxu0 %v294
        %821 = vmatmul.mubr.bf16.gmra.mrb[0].mxu0 %v293
        %v822 = vpop.f32.mrb[0].mxu0
        %v823 = vadd.f32 %v376, %v822
        %v824 = vpop.f32.mrb[0].mxu0
        %v825 = vadd.f32 %v380, %v824
        %v826 = vpop.f32.mrb[0].mxu0
        %v827 = vadd.f32 %v376, %v826
        %v828 = vpop.f32.mrb[0].mxu0
        %v829 = vadd.f32 %v380, %v828
        %830 = vmatprep.mubr.bf16.mxu0 %v296
        %831 = vmatmul.mubr.bf16.gmra.mrb[0].mxu0 %v295
        %v832 = vpop.f32.mrb[0].mxu0
        %v833 = vadd.f32 %v376, %v832
        %v834 = vpop.f32.mrb[0].mxu0
        %v835 = vadd.f32 %v380, %v834
        %v836 = vpop.f32.mrb[0].mxu0
        %v837 = vadd.f32 %v376, %v836
        %v838 = vpop.f32.mrb[0].mxu0
        %v839 = vadd.f32 %v380, %v838
        %840 = vmatprep.mubr.bf16.mxu0 %v298
        %841 = vmatmul.mubr.bf16.gmra.mrb[0].mxu0 %v297
        %v842 = vpop.f32.mrb[0].mxu0
        %v843 = vadd.f32 %v376, %v842
        %v844 = vpop.f32.mrb[0].mxu0
        %v845 = vadd.f32 %v380, %v844
        %v846 = vpop.f32.mrb[0].mxu0
        %v847 = vadd.f32 %v376, %v846
        %v848 = vpop.f32.mrb[0].mxu0
        %v849 = vadd.f32 %v380, %v848
        %850 = vdwg.mxu0
        %v851 = vmax.f32 %v740, 0.0
        %v852 = vmax.f32 %v742, 0.0
        %v853 = vmax.f32 %v813, 0.0
        %v854 = vmax.f32 %v815, 0.0
        %v855 = vmax.f32 %v744, 0.0
        %v856 = vmax.f32 %v746, 0.0
        %v857 = vmax.f32 %v817, 0.0
        %v858 = vmax.f32 %v819, 0.0
        %v859 = vmax.f32 %v750, 0.0
        %v860 = vmax.f32 %v752, 0.0
        %v861 = vmax.f32 %v823, 0.0
        %v862 = vmax.f32 %v825, 0.0
        %v863 = vmax.f32 %v754, 0.0
        %v864 = vmax.f32 %v756, 0.0
        %v865 = vmax.f32 %v827, 0.0
        %v866 = vmax.f32 %v829, 0.0
        %v867 = vmax.f32 %v760, 0.0
        %v868 = vmax.f32 %v762, 0.0
        %v869 = vmax.f32 %v833, 0.0
        %v870 = vmax.f32 %v835, 0.0
        %v871 = vmax.f32 %v764, 0.0
        %v872 = vmax.f32 %v766, 0.0
        %v873 = vmax.f32 %v837, 0.0
        %v874 = vmax.f32 %v839, 0.0
        %v875 = vmax.f32 %v770, 0.0
        %v876 = vmax.f32 %v772, 0.0
        %v877 = vmax.f32 %v843, 0.0
        %v878 = vmax.f32 %v845, 0.0
        %v879 = vmax.f32 %v774, 0.0
        %v880 = vmax.f32 %v776, 0.0
        %v881 = vmax.f32 %v847, 0.0
        %v882 = vmax.f32 %v849, 0.0
        %v883 = vpack.c.bf16 %v855, %v851
        %v884 = vpack.c.bf16 %v856, %v852
        %v885 = vpack.c.bf16 %v857, %v853
        %v886 = vpack.c.bf16 %v858, %v854
        %v887 = vpack.c.bf16 %v863, %v859
        %v888 = vpack.c.bf16 %v864, %v860
        %v889 = vpack.c.bf16 %v865, %v861
        %v890 = vpack.c.bf16 %v866, %v862
        %v891 = vpack.c.bf16 %v871, %v867
        %v892 = vpack.c.bf16 %v872, %v868
        %v893 = vpack.c.bf16 %v873, %v869
        %v894 = vpack.c.bf16 %v874, %v870
        %v895 = vpack.c.bf16 %v879, %v875
        %v896 = vpack.c.bf16 %v880, %v876
        %v897 = vpack.c.bf16 %v881, %v877
        %v898 = vpack.c.bf16 %v882, %v878
        %v899 = vld [vmem:[#allocation7] sm:$0xff]
        %v900 = vld [vmem:[#allocation7 + $0x8] sm:$0xff]
        %v901 = vld [vmem:[#allocation7 + $0x10] sm:$0xff]
        %v902 = vld [vmem:[#allocation7 + $0x18] sm:$0xff]
        %v903 = vld [vmem:[#allocation7 + $0x20] sm:$0xff]
        %v904 = vld [vmem:[#allocation7 + $0x28] sm:$0xff]
        %v905 = vld [vmem:[#allocation7 + $0x30] sm:$0xff]
        %v906 = vld [vmem:[#allocation7 + $0x38] sm:$0xff]
        %v907 = vld [vmem:[#allocation7 + $0x40] sm:$0xff]
        %v908 = vld [vmem:[#allocation7 + $0x48] sm:$0xff]
        %v909 = vld [vmem:[#allocation7 + $0x50] sm:$0xff]
        %v910 = vld [vmem:[#allocation7 + $0x58] sm:$0xff]
        %v911 = vld [vmem:[#allocation7 + $0x60] sm:$0xff]
        %v912 = vld [vmem:[#allocation7 + $0x68] sm:$0xff]
        %v913 = vld [vmem:[#allocation7 + $0x70] sm:$0xff]
        %v914 = vld [vmem:[#allocation7 + $0x78] sm:$0xff]
        %v915 = vld [vmem:[#allocation7 + $0x80] sm:$0xff]
        %v916 = vld [vmem:[#allocation7 + $0x88] sm:$0xff]
        %v917 = vld [vmem:[#allocation7 + $0x90] sm:$0xff]
        %v918 = vld [vmem:[#allocation7 + $0x98] sm:$0xff]
        %v919 = vld [vmem:[#allocation7 + $0xa0] sm:$0xff]
        %v920 = vld [vmem:[#allocation7 + $0xa8] sm:$0xff]
        %v921 = vld [vmem:[#allocation7 + $0xb0] sm:$0xff]
        %v922 = vld [vmem:[#allocation7 + $0xb8] sm:$0xff]
        %v923 = vld [vmem:[#allocation7 + $0xc0] sm:$0xff]
        %v924 = vld [vmem:[#allocation7 + $0xc8] sm:$0xff]
        %v925 = vld [vmem:[#allocation7 + $0xd0] sm:$0xff]
        %v926 = vld [vmem:[#allocation7 + $0xd8] sm:$0xff]
        %v927 = vld [vmem:[#allocation7 + $0xe0] sm:$0xff]
        %v928 = vld [vmem:[#allocation7 + $0xe8] sm:$0xff]
        %v929 = vld [vmem:[#allocation7 + $0xf0] sm:$0xff]
        %v930 = vld [vmem:[#allocation7 + $0xf8] sm:$0xff]
        %v931 = vld [vmem:[#allocation7 + $0x100] sm:$0xff]
        %v932 = vld [vmem:[#allocation7 + $0x108] sm:$0xff]
        %v933 = vld [vmem:[#allocation7 + $0x110] sm:$0xff]
        %v934 = vld [vmem:[#allocation7 + $0x118] sm:$0xff]
        %v935 = vld [vmem:[#allocation7 + $0x120] sm:$0xff]
        %v936 = vld [vmem:[#allocation7 + $0x128] sm:$0xff]
        %v937 = vld [vmem:[#allocation7 + $0x130] sm:$0xff]
        %v938 = vld [vmem:[#allocation7 + $0x138] sm:$0xff]
        %v939 = vld [vmem:[#allocation7 + $0x140] sm:$0xff]
        %v940 = vld [vmem:[#allocation7 + $0x148] sm:$0xff]
        %v941 = vld [vmem:[#allocation7 + $0x150] sm:$0xff]
        %v942 = vld [vmem:[#allocation7 + $0x158] sm:$0xff]
        %v943 = vld [vmem:[#allocation7 + $0x160] sm:$0xff]
        %v944 = vld [vmem:[#allocation7 + $0x168] sm:$0xff]
        %v945 = vld [vmem:[#allocation7 + $0x170] sm:$0xff]
        %v946 = vld [vmem:[#allocation7 + $0x178] sm:$0xff]
        %v947 = vld [vmem:[#allocation7 + $0x180] sm:$0xff]
        %v948 = vld [vmem:[#allocation7 + $0x188] sm:$0xff]
        %v949 = vld [vmem:[#allocation7 + $0x190] sm:$0xff]
        %v950 = vld [vmem:[#allocation7 + $0x198] sm:$0xff]
        %v951 = vld [vmem:[#allocation7 + $0x1a0] sm:$0xff]
        %v952 = vld [vmem:[#allocation7 + $0x1a8] sm:$0xff]
        %v953 = vld [vmem:[#allocation7 + $0x1b0] sm:$0xff]
        %v954 = vld [vmem:[#allocation7 + $0x1b8] sm:$0xff]
        %v955 = vld [vmem:[#allocation7 + $0x1c0] sm:$0xff]
        %v956 = vld [vmem:[#allocation7 + $0x1c8] sm:$0xff]
        %v957 = vld [vmem:[#allocation7 + $0x1d0] sm:$0xff]
        %v958 = vld [vmem:[#allocation7 + $0x1d8] sm:$0xff]
        %v959 = vld [vmem:[#allocation7 + $0x1e0] sm:$0xff]
        %v960 = vld [vmem:[#allocation7 + $0x1e8] sm:$0xff]
        %v961 = vld [vmem:[#allocation7 + $0x1f0] sm:$0xff]
        %v962 = vld [vmem:[#allocation7 + $0x1f8] sm:$0xff]
        %v963 = vld [vmem:[%s4] sm:$0x3]
        %v965 = vlaneseq
        %v966 = vshrl.u32 %v965, 7
        %v967 = vsub.s32 0, %v966
        %v968 = vrot.slane %v963, %v967
        %v969 = vlaneseq
        %v970 = vshrl.u32 %v969, 7
        %v971 = vsub.s32 1, %v970
        %v972 = vrot.slane %v963, %v971
        %v1039 = vunpack.c.l.b16 %v899
        %v1040 = vunpack.c.h.b16 %v899
        %v1041 = vunpack.c.l.b16 %v900
        %v1042 = vunpack.c.h.b16 %v900
        %v1043 = vunpack.c.l.b16 %v901
        %v1044 = vunpack.c.h.b16 %v901
        %v1045 = vunpack.c.l.b16 %v902
        %v1046 = vunpack.c.h.b16 %v902
        %v1047 = vunpack.c.l.b16 %v903
        %v1048 = vunpack.c.h.b16 %v903
        %v1049 = vunpack.c.l.b16 %v904
        %v1050 = vunpack.c.h.b16 %v904
        %v1051 = vunpack.c.l.b16 %v905
        %v1052 = vunpack.c.h.b16 %v905
        %v1053 = vunpack.c.l.b16 %v906
        %v1054 = vunpack.c.h.b16 %v906
        %v1055 = vunpack.c.l.b16 %v907
        %v1056 = vunpack.c.h.b16 %v907
        %v1057 = vunpack.c.l.b16 %v908
        %v1058 = vunpack.c.h.b16 %v908
        %v1059 = vunpack.c.l.b16 %v909
        %v1060 = vunpack.c.h.b16 %v909
        %v1061 = vunpack.c.l.b16 %v910
        %v1062 = vunpack.c.h.b16 %v910
        %v1063 = vunpack.c.l.b16 %v911
        %v1064 = vunpack.c.h.b16 %v911
        %v1065 = vunpack.c.l.b16 %v912
        %v1066 = vunpack.c.h.b16 %v912
        %v1067 = vunpack.c.l.b16 %v913
        %v1068 = vunpack.c.h.b16 %v913
        %v1069 = vunpack.c.l.b16 %v914
        %v1070 = vunpack.c.h.b16 %v914
        %v1071 = vunpack.c.l.b16 %v915
        %v1072 = vunpack.c.h.b16 %v915
        %v1073 = vunpack.c.l.b16 %v916
        %v1074 = vunpack.c.h.b16 %v916
        %v1075 = vunpack.c.l.b16 %v917
        %v1076 = vunpack.c.h.b16 %v917
        %v1077 = vunpack.c.l.b16 %v918
        %v1078 = vunpack.c.h.b16 %v918
        %v1079 = vunpack.c.l.b16 %v919
        %v1080 = vunpack.c.h.b16 %v919
        %v1081 = vunpack.c.l.b16 %v920
        %v1082 = vunpack.c.h.b16 %v920
        %v1083 = vunpack.c.l.b16 %v921
        %v1084 = vunpack.c.h.b16 %v921
        %v1085 = vunpack.c.l.b16 %v922
        %v1086 = vunpack.c.h.b16 %v922
        %v1087 = vunpack.c.l.b16 %v923
        %v1088 = vunpack.c.h.b16 %v923
        %v1089 = vunpack.c.l.b16 %v924
        %v1090 = vunpack.c.h.b16 %v924
        %v1091 = vunpack.c.l.b16 %v925
        %v1092 = vunpack.c.h.b16 %v925
        %v1093 = vunpack.c.l.b16 %v926
        %v1094 = vunpack.c.h.b16 %v926
        %v1095 = vunpack.c.l.b16 %v927
        %v1096 = vunpack.c.h.b16 %v927
        %v1097 = vunpack.c.l.b16 %v928
        %v1098 = vunpack.c.h.b16 %v928
        %v1099 = vunpack.c.l.b16 %v929
        %v1100 = vunpack.c.h.b16 %v929
        %v1101 = vunpack.c.l.b16 %v930
        %v1102 = vunpack.c.h.b16 %v930
        %v1103 = vunpack.c.l.b16 %v931
        %v1104 = vunpack.c.h.b16 %v931
        %v1105 = vunpack.c.l.b16 %v932
        %v1106 = vunpack.c.h.b16 %v932
        %v1107 = vunpack.c.l.b16 %v933
        %v1108 = vunpack.c.h.b16 %v933
        %v1109 = vunpack.c.l.b16 %v934
        %v1110 = vunpack.c.h.b16 %v934
        %v1111 = vunpack.c.l.b16 %v935
        %v1112 = vunpack.c.h.b16 %v935
        %v1113 = vunpack.c.l.b16 %v936
        %v1114 = vunpack.c.h.b16 %v936
        %v1115 = vunpack.c.l.b16 %v937
        %v1116 = vunpack.c.h.b16 %v937
        %v1117 = vunpack.c.l.b16 %v938
        %v1118 = vunpack.c.h.b16 %v938
        %v1119 = vunpack.c.l.b16 %v939
        %v1120 = vunpack.c.h.b16 %v939
        %v1121 = vunpack.c.l.b16 %v940
        %v1122 = vunpack.c.h.b16 %v940
        %v1123 = vunpack.c.l.b16 %v941
        %v1124 = vunpack.c.h.b16 %v941
        %v1125 = vunpack.c.l.b16 %v942
        %v1126 = vunpack.c.h.b16 %v942
        %v1127 = vunpack.c.l.b16 %v943
        %v1128 = vunpack.c.h.b16 %v943
        %v1129 = vunpack.c.l.b16 %v944
        %v1130 = vunpack.c.h.b16 %v944
        %v1131 = vunpack.c.l.b16 %v945
        %v1132 = vunpack.c.h.b16 %v945
        %v1133 = vunpack.c.l.b16 %v946
        %v1134 = vunpack.c.h.b16 %v946
        %v1135 = vunpack.c.l.b16 %v947
        %v1136 = vunpack.c.h.b16 %v947
        %v1137 = vunpack.c.l.b16 %v948
        %v1138 = vunpack.c.h.b16 %v948
        %v1139 = vunpack.c.l.b16 %v949
        %v1140 = vunpack.c.h.b16 %v949
        %v1141 = vunpack.c.l.b16 %v950
        %v1142 = vunpack.c.h.b16 %v950
        %v1143 = vunpack.c.l.b16 %v951
        %v1144 = vunpack.c.h.b16 %v951
        %v1145 = vunpack.c.l.b16 %v952
        %v1146 = vunpack.c.h.b16 %v952
        %v1147 = vunpack.c.l.b16 %v953
        %v1148 = vunpack.c.h.b16 %v953
        %v1149 = vunpack.c.l.b16 %v954
        %v1150 = vunpack.c.h.b16 %v954
        %v1151 = vunpack.c.l.b16 %v955
        %v1152 = vunpack.c.h.b16 %v955
        %v1153 = vunpack.c.l.b16 %v956
        %v1154 = vunpack.c.h.b16 %v956
        %v1155 = vunpack.c.l.b16 %v957
        %v1156 = vunpack.c.h.b16 %v957
        %v1157 = vunpack.c.l.b16 %v958
        %v1158 = vunpack.c.h.b16 %v958
        %v1159 = vunpack.c.l.b16 %v959
        %v1160 = vunpack.c.h.b16 %v959
        %v1161 = vunpack.c.l.b16 %v960
        %v1162 = vunpack.c.h.b16 %v960
        %v1163 = vunpack.c.l.b16 %v961
        %v1164 = vunpack.c.h.b16 %v961
        %v1165 = vunpack.c.l.b16 %v962
        %v1166 = vunpack.c.h.b16 %v962
        %v1167 = vpack.c.b16 %v1041, %v1039
        %v1168 = vpack.c.b16 %v1042, %v1040
        %v1169 = vpack.c.b16 %v1045, %v1043
        %v1170 = vpack.c.b16 %v1046, %v1044
        %v1171 = vpack.c.b16 %v1049, %v1047
        %v1172 = vpack.c.b16 %v1050, %v1048
        %v1173 = vpack.c.b16 %v1053, %v1051
        %v1174 = vpack.c.b16 %v1054, %v1052
        %v1175 = vpack.c.b16 %v1057, %v1055
        %v1176 = vpack.c.b16 %v1058, %v1056
        %v1177 = vpack.c.b16 %v1061, %v1059
        %v1178 = vpack.c.b16 %v1062, %v1060
        %v1179 = vpack.c.b16 %v1065, %v1063
        %v1180 = vpack.c.b16 %v1066, %v1064
        %v1181 = vpack.c.b16 %v1069, %v1067
        %v1182 = vpack.c.b16 %v1070, %v1068
        %v1183 = vpack.c.b16 %v1073, %v1071
        %v1184 = vpack.c.b16 %v1074, %v1072
        %v1185 = vpack.c.b16 %v1077, %v1075
        %v1186 = vpack.c.b16 %v1078, %v1076
        %v1187 = vpack.c.b16 %v1081, %v1079
        %v1188 = vpack.c.b16 %v1082, %v1080
        %v1189 = vpack.c.b16 %v1085, %v1083
        %v1190 = vpack.c.b16 %v1086, %v1084
        %v1191 = vpack.c.b16 %v1089, %v1087
        %v1192 = vpack.c.b16 %v1090, %v1088
        %v1193 = vpack.c.b16 %v1093, %v1091
        %v1194 = vpack.c.b16 %v1094, %v1092
        %v1195 = vpack.c.b16 %v1097, %v1095
        %v1196 = vpack.c.b16 %v1098, %v1096
        %v1197 = vpack.c.b16 %v1101, %v1099
        %v1198 = vpack.c.b16 %v1102, %v1100
        %v1199 = vpack.c.b16 %v1105, %v1103
        %v1200 = vpack.c.b16 %v1106, %v1104
        %v1201 = vpack.c.b16 %v1109, %v1107
        %v1202 = vpack.c.b16 %v1110, %v1108
        %v1203 = vpack.c.b16 %v1113, %v1111
        %v1204 = vpack.c.b16 %v1114, %v1112
        %v1205 = vpack.c.b16 %v1117, %v1115
        %v1206 = vpack.c.b16 %v1118, %v1116
        %v1207 = vpack.c.b16 %v1121, %v1119
        %v1208 = vpack.c.b16 %v1122, %v1120
        %v1209 = vpack.c.b16 %v1125, %v1123
        %v1210 = vpack.c.b16 %v1126, %v1124
        %v1211 = vpack.c.b16 %v1129, %v1127
        %v1212 = vpack.c.b16 %v1130, %v1128
        %v1213 = vpack.c.b16 %v1133, %v1131
        %v1214 = vpack.c.b16 %v1134, %v1132
        %v1215 = vpack.c.b16 %v1137, %v1135
        %v1216 = vpack.c.b16 %v1138, %v1136
        %v1217 = vpack.c.b16 %v1141, %v1139
        %v1218 = vpack.c.b16 %v1142, %v1140
        %v1219 = vpack.c.b16 %v1145, %v1143
        %v1220 = vpack.c.b16 %v1146, %v1144
        %v1221 = vpack.c.b16 %v1149, %v1147
        %v1222 = vpack.c.b16 %v1150, %v1148
        %v1223 = vpack.c.b16 %v1153, %v1151
        %v1224 = vpack.c.b16 %v1154, %v1152
        %v1225 = vpack.c.b16 %v1157, %v1155
        %v1226 = vpack.c.b16 %v1158, %v1156
        %v1227 = vpack.c.b16 %v1161, %v1159
        %v1228 = vpack.c.b16 %v1162, %v1160
        %v1229 = vpack.c.b16 %v1165, %v1163
        %v1230 = vpack.c.b16 %v1166, %v1164
        %1295 = vmatprep.subr.bf16.mxu0 %v1168
        %1296 = vmatpush1.bf16.msra.mxu0 %v1167
        %1297 = vmatprep.subr.bf16.mxu0 %v1170
        %1298 = vmatpush1.bf16.msra.mxu0 %v1169
        %1299 = vmatprep.subr.bf16.mxu0 %v1172
        %1300 = vmatpush1.bf16.msra.mxu0 %v1171
        %1301 = vmatprep.subr.bf16.mxu0 %v1174
        %1302 = vmatpush1.bf16.msra.mxu0 %v1173
        %1303 = vmatprep.subr.bf16.mxu0 %v1176
        %1304 = vmatpush1.bf16.msra.mxu0 %v1175
        %1305 = vmatprep.subr.bf16.mxu0 %v1178
        %1306 = vmatpush1.bf16.msra.mxu0 %v1177
        %1307 = vmatprep.subr.bf16.mxu0 %v1180
        %1308 = vmatpush1.bf16.msra.mxu0 %v1179
        %1309 = vmatprep.subr.bf16.mxu0 %v1182
        %1310 = vmatpush1.bf16.msra.mxu0 %v1181
        %1311 = vmatprep.subr.bf16.mxu0 %v1184
        %1312 = vmatpush1.bf16.msra.mxu0 %v1183
        %1313 = vmatprep.subr.bf16.mxu0 %v1186
        %1314 = vmatpush1.bf16.msra.mxu0 %v1185
        %1315 = vmatprep.subr.bf16.mxu0 %v1188
        %1316 = vmatpush1.bf16.msra.mxu0 %v1187
        %1317 = vmatprep.subr.bf16.mxu0 %v1190
        %1318 = vmatpush1.bf16.msra.mxu0 %v1189
        %1319 = vmatprep.subr.bf16.mxu0 %v1192
        %1320 = vmatpush1.bf16.msra.mxu0 %v1191
        %1321 = vmatprep.subr.bf16.mxu0 %v1194
        %1322 = vmatpush1.bf16.msra.mxu0 %v1193
        %1323 = vmatprep.subr.bf16.mxu0 %v1196
        %1324 = vmatpush1.bf16.msra.mxu0 %v1195
        %1325 = vmatprep.subr.bf16.mxu0 %v1198
        %1326 = vmatpush1.bf16.msra.mxu0 %v1197
        %1327 = vmatprep.mubr.bf16.mxu0 %v884
        %1328 = vmatmul.mubr.bf16.gmra.mrb[0].mxu0 %v883
        %v1329 = vpop.f32.mrb[0].mxu0
        %v1330 = vadd.f32 %v968, %v1329
        %v1331 = vpop.f32.mrb[0].mxu0
        %v1332 = vadd.f32 %v972, %v1331
        %v1333 = vpop.f32.mrb[0].mxu0
        %v1334 = vadd.f32 %v968, %v1333
        %v1335 = vpop.f32.mrb[0].mxu0
        %v1336 = vadd.f32 %v972, %v1335
        %1337 = vmatprep.mubr.bf16.mxu0 %v888
        %1338 = vmatmul.mubr.bf16.gmra.mrb[0].mxu0 %v887
        %v1339 = vpop.f32.mrb[0].mxu0
        %v1340 = vadd.f32 %v968, %v1339
        %v1341 = vpop.f32.mrb[0].mxu0
        %v1342 = vadd.f32 %v972, %v1341
        %v1343 = vpop.f32.mrb[0].mxu0
        %v1344 = vadd.f32 %v968, %v1343
        %v1345 = vpop.f32.mrb[0].mxu0
        %v1346 = vadd.f32 %v972, %v1345
        %1347 = vmatprep.mubr.bf16.mxu0 %v892
        %1348 = vmatmul.mubr.bf16.gmra.mrb[0].mxu0 %v891
        %v1349 = vpop.f32.mrb[0].mxu0
        %v1350 = vadd.f32 %v968, %v1349
        %v1351 = vpop.f32.mrb[0].mxu0
        %v1352 = vadd.f32 %v972, %v1351
        %v1353 = vpop.f32.mrb[0].mxu0
        %v1354 = vadd.f32 %v968, %v1353
        %v1355 = vpop.f32.mrb[0].mxu0
        %v1356 = vadd.f32 %v972, %v1355
        %1357 = vmatprep.mubr.bf16.mxu0 %v896
        %1358 = vmatmul.mubr.bf16.gmra.mrb[0].mxu0 %v895
        %v1359 = vpop.f32.mrb[0].mxu0
        %v1360 = vadd.f32 %v968, %v1359
        %v1361 = vpop.f32.mrb[0].mxu0
        %v1362 = vadd.f32 %v972, %v1361
        %v1363 = vpop.f32.mrb[0].mxu0
        %v1364 = vadd.f32 %v968, %v1363
        %v1365 = vpop.f32.mrb[0].mxu0
        %v1366 = vadd.f32 %v972, %v1365
        %1367 = vdwg.mxu0
        %1368 = vmatprep.subr.bf16.mxu0 %v1200
        %1369 = vmatpush1.bf16.msra.mxu0 %v1199
        %1370 = vmatprep.subr.bf16.mxu0 %v1202
        %1371 = vmatpush1.bf16.msra.mxu0 %v1201
        %1372 = vmatprep.subr.bf16.mxu0 %v1204
        %1373 = vmatpush1.bf16.msra.mxu0 %v1203
        %1374 = vmatprep.subr.bf16.mxu0 %v1206
        %1375 = vmatpush1.bf16.msra.mxu0 %v1205
        %1376 = vmatprep.subr.bf16.mxu0 %v1208
        %1377 = vmatpush1.bf16.msra.mxu0 %v1207
        %1378 = vmatprep.subr.bf16.mxu0 %v1210
        %1379 = vmatpush1.bf16.msra.mxu0 %v1209
        %1380 = vmatprep.subr.bf16.mxu0 %v1212
        %1381 = vmatpush1.bf16.msra.mxu0 %v1211
        %1382 = vmatprep.subr.bf16.mxu0 %v1214
        %1383 = vmatpush1.bf16.msra.mxu0 %v1213
        %1384 = vmatprep.subr.bf16.mxu0 %v1216
        %1385 = vmatpush1.bf16.msra.mxu0 %v1215
        %1386 = vmatprep.subr.bf16.mxu0 %v1218
        %1387 = vmatpush1.bf16.msra.mxu0 %v1217
        %1388 = vmatprep.subr.bf16.mxu0 %v1220
        %1389 = vmatpush1.bf16.msra.mxu0 %v1219
        %1390 = vmatprep.subr.bf16.mxu0 %v1222
        %1391 = vmatpush1.bf16.msra.mxu0 %v1221
        %1392 = vmatprep.subr.bf16.mxu0 %v1224
        %1393 = vmatpush1.bf16.msra.mxu0 %v1223
        %1394 = vmatprep.subr.bf16.mxu0 %v1226
        %1395 = vmatpush1.bf16.msra.mxu0 %v1225
        %1396 = vmatprep.subr.bf16.mxu0 %v1228
        %1397 = vmatpush1.bf16.msra.mxu0 %v1227
        %1398 = vmatprep.subr.bf16.mxu0 %v1230
        %1399 = vmatpush1.bf16.msra.mxu0 %v1229
        %1400 = vmatprep.mubr.bf16.mxu0 %v886
        %1401 = vmatmul.mubr.bf16.gmra.mrb[0].mxu0 %v885
        %v1402 = vpop.f32.mrb[0].mxu0
        %v1403 = vadd.f32 %v1330, %v1402
        %v1404 = vpop.f32.mrb[0].mxu0
        %v1405 = vadd.f32 %v1332, %v1404
        %v1406 = vpop.f32.mrb[0].mxu0
        %v1407 = vadd.f32 %v1334, %v1406
        %v1408 = vpop.f32.mrb[0].mxu0
        %v1409 = vadd.f32 %v1336, %v1408
        %1410 = vmatprep.mubr.bf16.mxu0 %v890
        %1411 = vmatmul.mubr.bf16.gmra.mrb[0].mxu0 %v889
        %v1412 = vpop.f32.mrb[0].mxu0
        %v1413 = vadd.f32 %v1340, %v1412
        %v1414 = vpop.f32.mrb[0].mxu0
        %v1415 = vadd.f32 %v1342, %v1414
        %v1416 = vpop.f32.mrb[0].mxu0
        %v1417 = vadd.f32 %v1344, %v1416
        %v1418 = vpop.f32.mrb[0].mxu0
        %v1419 = vadd.f32 %v1346, %v1418
        %1420 = vmatprep.mubr.bf16.mxu0 %v894
        %1421 = vmatmul.mubr.bf16.gmra.mrb[0].mxu0 %v893
        %v1422 = vpop.f32.mrb[0].mxu0
        %v1423 = vadd.f32 %v1350, %v1422
        %v1424 = vpop.f32.mrb[0].mxu0
        %v1425 = vadd.f32 %v1352, %v1424
        %v1426 = vpop.f32.mrb[0].mxu0
        %v1427 = vadd.f32 %v1354, %v1426
        %v1428 = vpop.f32.mrb[0].mxu0
        %v1429 = vadd.f32 %v1356, %v1428
        %1430 = vmatprep.mubr.bf16.mxu0 %v898
        %1431 = vmatmul.mubr.bf16.gmra.mrb[0].mxu0 %v897
        %v1432 = vpop.f32.mrb[0].mxu0
        %v1433 = vadd.f32 %v1360, %v1432
        %v1434 = vpop.f32.mrb[0].mxu0
        %v1435 = vadd.f32 %v1362, %v1434
        %v1436 = vpop.f32.mrb[0].mxu0
        %v1437 = vadd.f32 %v1364, %v1436
        %v1438 = vpop.f32.mrb[0].mxu0
        %v1439 = vadd.f32 %v1366, %v1438
        %1440 = vdwg.mxu0
        %v1441 = vmax.f32 %v1403, 0.0
        %v1442 = vmax.f32 %v1405, 0.0
        %v1443 = vmax.f32 %v1407, 0.0
        %v1444 = vmax.f32 %v1409, 0.0
        %v1445 = vmax.f32 %v1413, 0.0
        %v1446 = vmax.f32 %v1415, 0.0
        %v1447 = vmax.f32 %v1417, 0.0
        %v1448 = vmax.f32 %v1419, 0.0
        %v1449 = vmax.f32 %v1423, 0.0
        %v1450 = vmax.f32 %v1425, 0.0
        %v1451 = vmax.f32 %v1427, 0.0
        %v1452 = vmax.f32 %v1429, 0.0
        %v1453 = vmax.f32 %v1433, 0.0
        %v1454 = vmax.f32 %v1435, 0.0
        %v1455 = vmax.f32 %v1437, 0.0
        %v1456 = vmax.f32 %v1439, 0.0
        %1457 = vst [vmem:[%s272] sm:$0xff] %v1441
        %1458 = vst [vmem:[%s272 + $0x8] sm:$0xff] %v1442
        %1459 = vst [vmem:[%s272 + $0x10] sm:$0xff] %v1443
        %1460 = vst [vmem:[%s272 + $0x18] sm:$0xff] %v1444
        %1461 = vst [vmem:[%s272 + $0x20] sm:$0xff] %v1445
        %1462 = vst [vmem:[%s272 + $0x28] sm:$0xff] %v1446
        %1463 = vst [vmem:[%s272 + $0x30] sm:$0xff] %v1447
        %1464 = vst [vmem:[%s272 + $0x38] sm:$0xff] %v1448
        %1465 = vst [vmem:[%s272 + $0x40] sm:$0xff] %v1449
        %1466 = vst [vmem:[%s272 + $0x48] sm:$0xff] %v1450
        %1467 = vst [vmem:[%s272 + $0x50] sm:$0xff] %v1451
        %1468 = vst [vmem:[%s272 + $0x58] sm:$0xff] %v1452
        %1469 = vst [vmem:[%s272 + $0x60] sm:$0xff] %v1453
        %1470 = vst [vmem:[%s272 + $0x68] sm:$0xff] %v1454
        %1471 = vst [vmem:[%s272 + $0x70] sm:$0xff] %v1455
        %1472 = vst [vmem:[%s272 + $0x78] sm:$0xff] %v1456
        %s1473 = sand.u32 %s141, 1
        %s1474 = scalar_lea.sflag [#allocation4], %s1473
        %s1475 = sand.u32 %s141, 1
        %s1476 = smul.addr %s1475, 128
        %s1477 = scalar_lea.vmem [#allocation8], %s1476
        // Predicated region
        $region53: #{tpu_custom_call.1} parent=39 // pred_check
          %p1478 = pneg %p151
        $region54: #{tpu_custom_call.1} parent=39 // pred_check_branch
          %1480 = sbr.rel (%p1478) target = $region56
        $region55: #{tpu_custom_call.1} parent=39 // pred_region
          %s1481 = smul.u32 8, %s23
          %s1483 = ssub.s32 2048, 2048
          %1484 = vsyncadd %s1474, %s1483
          %s1485 = smul.addr %s1481, 2
          %s1486 = smul.addr %s1485, 128
          %s1487 = scalar_lea.hbm %s5, %s1486
          %s1488 = sshll.u32 %s1477, 4
          %s1489 = int_to_ptr.vmem [resolvable:$true] %s1488
          %1494 = dma.vmem_to_hbm [thread:$0]  %s1489, 2048, %s1487, %s1474, 256, 256, 16
        $region56: #{tpu_custom_call.1} parent=39 // pred_fallthru
          _
      $region40: #{tpu_custom_call.1} parent=5 // pred_fallthru
        _
      %p1495 = scmp.le.s32.totalorder 2, %s18
      // Predicated region
      $region57: #{tpu_custom_call.1} parent=5 // pred_check
        %p1496 = pneg %p1495
      $region58: #{tpu_custom_call.1} parent=5 // pred_check_branch
        %1498 = sbr.rel (%p1496) target = $region60
      $region59: #{tpu_custom_call.1} parent=5 // pred_region
        %s1499 = ssub.s32 %s18, 2
        // Predicated region
        $region61: #{tpu_custom_call.1} parent=59 // pred_check
          %p1500 = pneg %p157
        $region62: #{tpu_custom_call.1} parent=59 // pred_check_branch
          %1502 = sbr.rel (%p1500) target = $region64
        $region63: #{tpu_custom_call.1} parent=59 // pred_region
          %s1503 = sand.u32 %s142, 1
          %s1504 = scalar_lea.sflag [#allocation4], %s1503
          %s1505 = sand.u32 %s142, 1
          %s1506 = smul.addr %s1505, 128
          %s1507 = scalar_lea.vmem [#allocation8], %s1506
          %1508 = dma.done %s1504, 2048
        $region64: #{tpu_custom_call.1} parent=59 // pred_fallthru
          _
      $region60: #{tpu_custom_call.1} parent=5 // pred_fallthru
        _
    $region6: #{tpu_custom_call.1} parent=1 // loop_footer
      %s22 = sadd.s32 1, %s18
    $region7: #{tpu_custom_call.1} parent=1 // loop_footer_branch
      %17 = sbr.rel target = $region3
    $region8: #{tpu_custom_call.1} parent=1 // loop_exit
      _
    %1509 = vsyncpa [#allocation3], 1
    %s1510 = scalar_lea.sflag [#allocation3], 1
    %1511 = vsyncpa %s1510, 1
    %1512 = vsyncpa [#allocation6], 1
    %1513 = vsyncpa [#allocation4], 1
    %s1514 = scalar_lea.sflag [#allocation4], 1
    %1515 = vsyncpa %s1514, 1

// kernel: tpu_custom_call.1
$region0: #{tpu_custom_call.1}
  #allocation0 [shape = 'u32[]', space=smem, size = 0x4, offset = 0x4, fixed_abs, tag = 'smem constant byte address 0x4 - core index']
  #allocation1 [shape = 'u32[144,128]{1,0:T(1,128)}', space=vmem, size = 0x12000, scoped, tag = 'internal scratch']
  %s0 = inlined_call_operand.hbm [shape: f32[128,256], index: 0, kind: input, shape index: {}]
  %s1 = inlined_call_operand.hbm [shape: bf16[256,512], index: 1, kind: input, shape index: {}]
  %s2 = inlined_call_operand.vmem [shape: f32[1,512], index: 2, kind: input, shape index: {}]
  %s3 = inlined_call_operand.hbm [shape: bf16[512,256], index: 3, kind: input, shape index: {}]
  %s4 = inlined_call_operand.vmem [shape: f32[1,256], index: 4, kind: input, shape index: {}]
  %s5 = inlined_call_operand.hbm [shape: f32[128,256], index: 5, kind: output, shape index: {}]
  %s6 = sld [smem:[#allocation0]]
  $region65: #{tpu_custom_call.1} parent=0
    _
  %s8 = ssub.s32 1, %s6
  %s9 = scalar_select 0, %s8, %s6
  $region1: #{tpu_custom_call.1} parent=0
    #allocation2 [shape = 'u8[131072]{0}', space=vmem, size = 0x20000, scoped, tag = 'input window, operand 0']
    #allocation3 [shape = 's32[2]{0}', space=sflag, size = 0x8, scoped, tag = 'scoped memory for tpu_custom_call.1']
    #allocation4 [shape = 's32[2]{0}', space=sflag, size = 0x8, scoped, tag = 'scoped memory for tpu_custom_call.1']
    #allocation5 [shape = 'u8[262144]{0}', space=vmem, size = 0x40000, scoped, tag = 'input window, operand 1, single buffered']
    #allocation6 [shape = 's32[1]{0}', space=sflag, size = 0x4, scoped, tag = 'scoped memory for tpu_custom_call.1']
    #allocation7 [shape = 'u8[262144]{0}', space=vmem, size = 0x40000, scoped, tag = 'input window, operand 3, single buffered']
    #allocation8 [shape = 'u8[131072]{0}', space=vmem, size = 0x20000, scoped, tag = 'output window, operand 0']
    %10 = vsyncpa [#allocation3], 0
    %s11 = scalar_lea.sflag [#allocation3], 1
    %12 = vsyncpa %s11, 0
    %13 = vsyncpa [#allocation6], 0
    %14 = vsyncpa [#allocation4], 0
    %s15 = scalar_lea.sflag [#allocation4], 1
    %16 = vsyncpa %s15, 0
    loop: start=0, step=1, limit=4
    $region2: #{tpu_custom_call.1} parent=1 // loop_pre_header
      _
    $region3: #{tpu_custom_call.1} parent=1 // loop_header
      %s18 = sphi 0, %s22
      %p19 = scmp.ge.s32.totalorder %s18, 4
      %s28 = sphi 0, %s30
      %s31 = sphi 0, %s28
      %s32 = sphi 0, %s31
      %s48 = sphi 0, %s32
      %s52 = sphi 0, %s52
      %s54 = sphi 0, %s52
      %s55 = sphi 0, %s54
      %s69 = sphi 0, %s55
      %s73 = sphi 0, %s73
      %s75 = sphi 0, %s73
      %s76 = sphi 0, %s75
      %s90 = sphi 0, %s76
      %s94 = sphi 0, %s94
      %s96 = sphi 0, %s94
      %s97 = sphi 0, %s96
      %s111 = sphi 0, %s97
      %s115 = sphi 0, %s115
      %s117 = sphi 0, %s115
      %s118 = sphi 0, %s117
      %s132 = sphi 0, %s118
      %s138 = sphi 0, %s140
      %s141 = sphi 0, %s138
      %s142 = sphi 0, %s141
      %s158 = sphi 0, %s142
    $region4: #{tpu_custom_call.1} parent=1 // loop_header_branch
      %21 = sbr.rel (%p19) target = $region8
    $region5: #{tpu_custom_call.1} parent=1 // loop_body
      %s23 = ssub.s32 %s18, 1
      %s24 = ssub.s32 %s18, 2
      %s25 = sadd.s32 %s18, 1
      %s26 = ssub.s32 %s18, %s25
      %p27 = scmp.eq.s32.totalorder %s26, 0
      %s29 = sadd.s32 %s28, 1
      %s30 = scalar_select %p27, %s28, %s29
      %p33 = pneg %p27
      %p34 = scmp.eq.s32.totalorder %s18, 1
      %p35 = por %p33, %p34
      %p36 = scmp.ne.s32.totalorder %s28, %s31
      %p37 = scmp.eq.s32.totalorder %s18, 0
      %p38 = por %p36, %p37
      %p39 = scmp.ne.s32.totalorder %s28, %s31
      %p40 = scmp.eq.s32.totalorder %s23, 1
      %p41 = por %p39, %p40
      %p42 = scmp.ne.s32.totalorder %s31, %s32
      %p43 = scmp.eq.s32.totalorder %s23, 0
      %p44 = por %p42, %p43
      %p45 = scmp.ne.s32.totalorder %s31, %s32
      %p46 = scmp.eq.s32.totalorder %s24, 1
      %p47 = por %p45, %p46
      %p49 = scmp.ne.s32.totalorder %s32, %s48
      %p50 = scmp.eq.s32.totalorder %s24, 0
      %p51 = por %p49, %p50
      %s53 = sadd.s32 %s52, 1
      %p56 = scmp.eq.s32.totalorder %s18, 1
      %p57 = scmp.ne.s32.totalorder %s52, %s54
      %p58 = scmp.eq.s32.totalorder %s18, 0
      %p59 = por %p57, %p58
      %p60 = scmp.ne.s32.totalorder %s52, %s54
      %p61 = scmp.eq.s32.totalorder %s23, 1
      %p62 = por %p60, %p61
      %p63 = scmp.ne.s32.totalorder %s54, %s55
      %p64 = scmp.eq.s32.totalorder %s23, 0
      %p65 = por %p63, %p64
      %p66 = scmp.ne.s32.totalorder %s54, %s55
      %p67 = scmp.eq.s32.totalorder %s24, 1
      %p68 = por %p66, %p67
      %p70 = scmp.ne.s32.totalorder %s55, %s69
      %p71 = scmp.eq.s32.totalorder %s24, 0
      %p72 = por %p70, %p71
      %s74 = sadd.s32 %s73, 1
      %p77 = scmp.eq.s32.totalorder %s18, 1
      %p78 = scmp.ne.s32.totalorder %s73, %s75
      %p79 = scmp.eq.s32.totalorder %s18, 0
      %p80 = por %p78, %p79
      %p81 = scmp.ne.s32.totalorder %s73, %s75
      %p82 = scmp.eq.s32.totalorder %s23, 1
      %p83 = por %p81, %p82
      %p84 = scmp.ne.s32.totalorder %s75, %s76
      %p85 = scmp.eq.s32.totalorder %s23, 0
      %p86 = por %p84, %p85
      %p87 = scmp.ne.s32.totalorder %s75, %s76
      %p88 = scmp.eq.s32.totalorder %s24, 1
      %p89 = por %p87, %p88
      %p91 = scmp.ne.s32.totalorder %s76, %s90
      %p92 = scmp.eq.s32.totalorder %s24, 0
      %p93 = por %p91, %p92
      %s95 = sadd.s32 %s94, 1
      %p98 = scmp.eq.s32.totalorder %s18, 1
      %p99 = scmp.ne.s32.totalorder %s94, %s96
      %p100 = scmp.eq.s32.totalorder %s18, 0
      %p101 = por %p99, %p100
      %p102 = scmp.ne.s32.totalorder %s94, %s96
      %p103 = scmp.eq.s32.totalorder %s23, 1
      %p104 = por %p102, %p103
      %p105 = scmp.ne.s32.totalorder %s96, %s97
      %p106 = scmp.eq.s32.totalorder %s23, 0
      %p107 = por %p105, %p106
      %p108 = scmp.ne.s32.totalorder %s96, %s97
      %p109 = scmp.eq.s32.totalorder %s24, 1
      %p110 = por %p108, %p109
      %p112 = scmp.ne.s32.totalorder %s97, %s111
      %p113 = scmp.eq.s32.totalorder %s24, 0
      %p114 = por %p112, %p113
      %s116 = sadd.s32 %s115, 1
      %p119 = scmp.eq.s32.totalorder %s18, 1
      %p120 = scmp.ne.s32.totalorder %s115, %s117
      %p121 = scmp.eq.s32.totalorder %s18, 0
      %p122 = por %p120, %p121
      %p123 = scmp.ne.s32.totalorder %s115, %s117
      %p124 = scmp.eq.s32.totalorder %s23, 1
      %p125 = por %p123, %p124
      %p126 = scmp.ne.s32.totalorder %s117, %s118
      %p127 = scmp.eq.s32.totalorder %s23, 0
      %p128 = por %p126, %p127
      %p129 = scmp.ne.s32.totalorder %s117, %s118
      %p130 = scmp.eq.s32.totalorder %s24, 1
      %p131 = por %p129, %p130
      %p133 = scmp.ne.s32.totalorder %s118, %s132
      %p134 = scmp.eq.s32.totalorder %s24, 0
      %p135 = por %p133, %p134
      %s136 = ssub.s32 %s18, %s25
      %p137 = scmp.eq.s32.totalorder %s136, 0
      %s139 = sadd.s32 %s138, 1
      %s140 = scalar_select %p137, %s138, %s139
      %p143 = pneg %p137
      %p144 = scmp.eq.s32.totalorder %s18, 1
      %p145 = por %p143, %p144
      %p146 = scmp.ne.s32.totalorder %s138, %s141
      %p147 = scmp.eq.s32.totalorder %s18, 0
      %p148 = por %p146, %p147
      %p149 = scmp.ne.s32.totalorder %s138, %s141
      %p150 = scmp.eq.s32.totalorder %s23, 1
      %p151 = por %p149, %p150
      %p152 = scmp.ne.s32.totalorder %s141, %s142
      %p153 = scmp.eq.s32.totalorder %s23, 0
      %p154 = por %p152, %p153
      %p155 = scmp.ne.s32.totalorder %s141, %s142
      %p156 = scmp.eq.s32.totalorder %s24, 1
      %p157 = por %p155, %p156
      %p159 = scmp.ne.s32.totalorder %s142, %s158
      %p160 = scmp.eq.s32.totalorder %s24, 0
      %p161 = por %p159, %p160
      %p162 = scmp.le.s32.totalorder 1, %s18
      %p163 = scmp.lt.s32.totalorder %s18, 3
      %p164 = pnand %p162, %p163
      %p165 = pneg %p164
      // Predicated region
      $region9: #{tpu_custom_call.1} parent=5 // pred_check
        _
      $region10: #{tpu_custom_call.1} parent=5 // pred_check_branch
        %167 = sbr.rel (%p164) target = $region12
      $region11: #{tpu_custom_call.1} parent=5 // pred_region
        %s168 = ssub.s32 %s18, 1
        // Predicated region
        $region13: #{tpu_custom_call.1} parent=11 // pred_check
          %p169 = pneg %p65
        $region14: #{tpu_custom_call.1} parent=11 // pred_check_branch
          %171 = sbr.rel (%p169) target = $region16
        $region15: #{tpu_custom_call.1} parent=11 // pred_region
          %s173 = ssub.s32 8192, 8192
          %174 = vsyncadd [#allocation6], %s173
          %s175 = sshll.u32 [#allocation5], 4
          %s176 = int_to_ptr.vmem [resolvable:$true] %s175
          %181 = dma.hbm_to_vmem [thread:$0]  %s1, 8192, %s176, [#allocation6], 256, 256, 16
        $region16: #{tpu_custom_call.1} parent=11 // pred_fallthru
          _
        // Predicated region
        $region17: #{tpu_custom_call.1} parent=11 // pred_check
          %p182 = pneg %p86
        $region18: #{tpu_custom_call.1} parent=11 // pred_check_branch
          %184 = sbr.rel (%p182) target = $region20
        $region19: #{tpu_custom_call.1} parent=11 // pred_region
          _
        $region20: #{tpu_custom_call.1} parent=11 // pred_fallthru
          _
        // Predicated region
        $region21: #{tpu_custom_call.1} parent=11 // pred_check
          %p185 = pneg %p107
        $region22: #{tpu_custom_call.1} parent=11 // pred_check_branch
          %187 = sbr.rel (%p185) target = $region24
        $region23: #{tpu_custom_call.1} parent=11 // pred_region
          %s189 = ssub.s32 8192, 8192
          %190 = vsyncadd [#allocation6], %s189
          %s191 = sshll.u32 [#allocation7], 4
          %s192 = int_to_ptr.vmem [resolvable:$true] %s191
          %197 = dma.hbm_to_vmem [thread:$0]  %s3, 8192, %s192, [#allocation6], 128, 128, 8
        $region24: #{tpu_custom_call.1} parent=11 // pred_fallthru
          _
        // Predicated region
        $region25: #{tpu_custom_call.1} parent=11 // pred_check
          %p198 = pneg %p128
        $region26: #{tpu_custom_call.1} parent=11 // pred_check_branch
          %200 = sbr.rel (%p198) target = $region28
        $region27: #{tpu_custom_call.1} parent=11 // pred_region
          _
        $region28: #{tpu_custom_call.1} parent=11 // pred_fallthru
          _
      $region12: #{tpu_custom_call.1} parent=5 // pred_fallthru
        _
      %p201 = scmp.lt.s32.totalorder %s18, 2
      // Predicated region
      $region29: #{tpu_custom_call.1} parent=5 // pred_check
        %p202 = pneg %p201
      $region30: #{tpu_custom_call.1} parent=5 // pred_check_branch
        %204 = sbr.rel (%p202) target = $region32
      $region31: #{tpu_custom_call.1} parent=5 // pred_region
        // Predicated region
        $region33: #{tpu_custom_call.1} parent=31 // pred_check
          %p205 = pneg %p38
        $region34: #{tpu_custom_call.1} parent=31 // pred_check_branch
          %207 = sbr.rel (%p205) target = $region36
        $region35: #{tpu_custom_call.1} parent=31 // pred_region
          %s208 = sand.u32 %s28, 1
          %s209 = scalar_lea.sflag [#allocation3], %s208
          %s210 = sand.u32 %s28, 1
          %s211 = smul.addr %s210, 128
          %s212 = scalar_lea.vmem [#allocation2], %s211
          %s213 = smul.u32 8, %s18
          %s215 = ssub.s32 2048, 2048
          %216 = vsyncadd %s209, %s215
          %s217 = smul.addr %s213, 2
          %s218 = smul.addr %s217, 128
          %s219 = scalar_lea.hbm %s0, %s218
          %s220 = sshll.u32 %s212, 4
          %s221 = int_to_ptr.vmem [resolvable:$true] %s220
          %226 = dma.hbm_to_vmem [thread:$0]  %s219, 2048, %s221, %s209, 256, 256, 16
        $region36: #{tpu_custom_call.1} parent=31 // pred_fallthru
          _
      $region32: #{tpu_custom_call.1} parent=5 // pred_fallthru
        _
      %p227 = scmp.le.s32.totalorder 1, %s18
      %p228 = scmp.lt.s32.totalorder %s18, 3
      %p229 = pnand %p227, %p228
      %p230 = pneg %p229
      // Predicated region
      $region37: #{tpu_custom_call.1} parent=5 // pred_check
        _
      $region38: #{tpu_custom_call.1} parent=5 // pred_check_branch
        %232 = sbr.rel (%p229) target = $region40
      $region39: #{tpu_custom_call.1} parent=5 // pred_region
        %s233 = ssub.s32 %s18, 1
        %s234 = sand.u32 %s31, 1
        %s235 = scalar_lea.sflag [#allocation3], %s234
        %s236 = sand.u32 %s31, 1
        %s237 = smul.addr %s236, 128
        %s238 = scalar_lea.vmem [#allocation2], %s237
        // Predicated region
        $region41: #{tpu_custom_call.1} parent=39 // pred_check
          %p239 = pneg %p44
        $region42: #{tpu_custom_call.1} parent=39 // pred_check_branch
          %241 = sbr.rel (%p239) target = $region44
        $region43: #{tpu_custom_call.1} parent=39 // pred_region
          %242 = dma.done %s235, 2048
        $region44: #{tpu_custom_call.1} parent=39 // pred_fallthru
          _
        // Predicated region
        $region45: #{tpu_custom_call.1} parent=39 // pred_check
          %p243 = pneg %p65
        $region46: #{tpu_custom_call.1} parent=39 // pred_check_branch
          %245 = sbr.rel (%p243) target = $region48
        $region47: #{tpu_custom_call.1} parent=39 // pred_region
          %246 = dma.done [#allocation6], 8192
        $region48: #{tpu_custom_call.1} parent=39 // pred_fallthru
          _
        // Predicated region
        $region49: #{tpu_custom_call.1} parent=39 // pred_check
          %p247 = pneg %p107
        $region50: #{tpu_custom_call.1} parent=39 // pred_check_branch
          %249 = sbr.rel (%p247) target = $region52
        $region51: #{tpu_custom_call.1} parent=39 // pred_region
          %250 = dma.done [#allocation6], 8192
        $region52: #{tpu_custom_call.1} parent=39 // pred_fallthru
          _
        %s251 = sand.u32 %s31, 1
        %s252 = scalar_lea.sflag [#allocation3], %s251
        %s253 = sand.u32 %s31, 1
        %s254 = smul.addr %s253, 128
        %s255 = scalar_lea.vmem [#allocation2], %s254
        %p256 = pneg %p44
        %p257 = pneg %p41
        %p258 = pneg %p65
        %p259 = pneg %p62
        %p260 = pneg %p86
        %p261 = pneg %p83
        %p262 = pneg %p107
        %p263 = pneg %p104
        %p264 = pneg %p128
        %p265 = pneg %p125
        %p266 = pneg %p154
        %p267 = pneg %p151
        %s268 = sand.u32 %s141, 1
        %s269 = scalar_lea.sflag [#allocation4], %s268
        %s270 = sand.u32 %s141, 1
        %s271 = smul.addr %s270, 128
        %s272 = scalar_lea.vmem [#allocation8], %s271
        %s273 = smul.u32 8, %s23
        %s274 = smul.u32 8, %s23
        %v275 = vld [vmem:[%s238] sm:$0xff]
        %v276 = vld [vmem:[%s238 + $0x8] sm:$0xff]
        %v277 = vld [vmem:[%s238 + $0x10] sm:$0xff]
        %v278 = vld [vmem:[%s238 + $0x18] sm:$0xff]
        %v279 = vld [vmem:[%s238 + $0x20] sm:$0xff]
        %v280 = vld [vmem:[%s238 + $0x28] sm:$0xff]
        %v281 = vld [vmem:[%s238 + $0x30] sm:$0xff]
        %v282 = vld [vmem:[%s238 + $0x38] sm:$0xff]
        %v283 = vld [vmem:[%s238 + $0x40] sm:$0xff]
        %v284 = vld [vmem:[%s238 + $0x48] sm:$0xff]
        %v285 = vld [vmem:[%s238 + $0x50] sm:$0xff]
        %v286 = vld [vmem:[%s238 + $0x58] sm:$0xff]
        %v287 = vld [vmem:[%s238 + $0x60] sm:$0xff]
        %v288 = vld [vmem:[%s238 + $0x68] sm:$0xff]
        %v289 = vld [vmem:[%s238 + $0x70] sm:$0xff]
        %v290 = vld [vmem:[%s238 + $0x78] sm:$0xff]
        %v291 = vpack.c.bf16 %v277, %v275
        %v292 = vpack.c.bf16 %v278, %v276
        %v293 = vpack.c.bf16 %v281, %v279
        %v294 = vpack.c.bf16 %v282, %v280
        %v295 = vpack.c.bf16 %v285, %v283
        %v296 = vpack.c.bf16 %v286, %v284
        %v297 = vpack.c.bf16 %v289, %v287
        %v298 = vpack.c.bf16 %v290, %v288
        %v299 = vld [vmem:[#allocation5] sm:$0xff]
        %v300 = vld [vmem:[#allocation5 + $0x8] sm:$0xff]
        %v301 = vld [vmem:[#allocation5 + $0x10] sm:$0xff]
        %v302 = vld [vmem:[#allocation5 + $0x18] sm:$0xff]
        %v303 = vld [vmem:[#allocation5 + $0x20] sm:$0xff]
        %v304 = vld [vmem:[#allocation5 + $0x28] sm:$0xff]
        %v305 = vld [vmem:[#allocation5 + $0x30] sm:$0xff]
        %v306 = vld [vmem:[#allocation5 + $0x38] sm:$0xff]
        %v307 = vld [vmem:[#allocation5 + $0x40] sm:$0xff]
        %v308 = vld [vmem:[#allocation5 + $0x48] sm:$0xff]
        %v309 = vld [vmem:[#allocation5 + $0x50] sm:$0xff]
        %v310 = vld [vmem:[#allocation5 + $0x58] sm:$0xff]
        %v311 = vld [vmem:[#allocation5 + $0x60] sm:$0xff]
        %v312 = vld [vmem:[#allocation5 + $0x68] sm:$0xff]
        %v313 = vld [vmem:[#allocation5 + $0x70] sm:$0xff]
        %v314 = vld [vmem:[#allocation5 + $0x78] sm:$0xff]
        %v315 = vld [vmem:[#allocation5 + $0x80] sm:$0xff]
        %v316 = vld [vmem:[#allocation5 + $0x88] sm:$0xff]
        %v317 = vld [vmem:[#allocation5 + $0x90] sm:$0xff]
        %v318 = vld [vmem:[#allocation5 + $0x98] sm:$0xff]
        %v319 = vld [vmem:[#allocation5 + $0xa0] sm:$0xff]
        %v320 = vld [vmem:[#allocation5 + $0xa8] sm:$0xff]
        %v321 = vld [vmem:[#allocation5 + $0xb0] sm:$0xff]
        %v322 = vld [vmem:[#allocation5 + $0xb8] sm:$0xff]
        %v323 = vld [vmem:[#allocation5 + $0xc0] sm:$0xff]
        %v324 = vld [vmem:[#allocation5 + $0xc8] sm:$0xff]
        %v325 = vld [vmem:[#allocation5 + $0xd0] sm:$0xff]
        %v326 = vld [vmem:[#allocation5 + $0xd8] sm:$0xff]
        %v327 = vld [vmem:[#allocation5 + $0xe0] sm:$0xff]
        %v328 = vld [vmem:[#allocation5 + $0xe8] sm:$0xff]
        %v329 = vld [vmem:[#allocation5 + $0xf0] sm:$0xff]
        %v330 = vld [vmem:[#allocation5 + $0xf8] sm:$0xff]
        %v331 = vld [vmem:[#allocation5 + $0x100] sm:$0xff]
        %v332 = vld [vmem:[#allocation5 + $0x108] sm:$0xff]
        %v333 = vld [vmem:[#allocation5 + $0x110] sm:$0xff]
        %v334 = vld [vmem:[#allocation5 + $0x118] sm:$0xff]
        %v335 = vld [vmem:[#allocation5 + $0x120] sm:$0xff]
        %v336 = vld [vmem:[#allocation5 + $0x128] sm:$0xff]
        %v337 = vld [vmem:[#allocation5 + $0x130] sm:$0xff]
        %v338 = vld [vmem:[#allocation5 + $0x138] sm:$0xff]
        %v339 = vld [vmem:[#allocation5 + $0x140] sm:$0xff]
        %v340 = vld [vmem:[#allocation5 + $0x148] sm:$0xff]
        %v341 = vld [vmem:[#allocation5 + $0x150] sm:$0xff]
        %v342 = vld [vmem:[#allocation5 + $0x158] sm:$0xff]
        %v343 = vld [vmem:[#allocation5 + $0x160] sm:$0xff]
        %v344 = vld [vmem:[#allocation5 + $0x168] sm:$0xff]
        %v345 = vld [vmem:[#allocation5 + $0x170] sm:$0xff]
        %v346 = vld [vmem:[#allocation5 + $0x178] sm:$0xff]
        %v347 = vld [vmem:[#allocation5 + $0x180] sm:$0xff]
        %v348 = vld [vmem:[#allocation5 + $0x188] sm:$0xff]
        %v349 = vld [vmem:[#allocation5 + $0x190] sm:$0xff]
        %v350 = vld [vmem:[#allocation5 + $0x198] sm:$0xff]
        %v351 = vld [vmem:[#allocation5 + $0x1a0] sm:$0xff]
        %v352 = vld [vmem:[#allocation5 + $0x1a8] sm:$0xff]
        %v353 = vld [vmem:[#allocation5 + $0x1b0] sm:$0xff]
        %v354 = vld [vmem:[#allocation5 + $0x1b8] sm:$0xff]
        %v355 = vld [vmem:[#allocation5 + $0x1c0] sm:$0xff]
        %v356 = vld [vmem:[#allocation5 + $0x1c8] sm:$0xff]
        %v357 = vld [vmem:[#allocation5 + $0x1d0] sm:$0xff]
        %v358 = vld [vmem:[#allocation5 + $0x1d8] sm:$0xff]
        %v359 = vld [vmem:[#allocation5 + $0x1e0] sm:$0xff]
        %v360 = vld [vmem:[#allocation5 + $0x1e8] sm:$0xff]
        %v361 = vld [vmem:[#allocation5 + $0x1f0] sm:$0xff]
        %v362 = vld [vmem:[#allocation5 + $0x1f8] sm:$0xff]
        %v363 = vld [vmem:[%s2] sm:$0xf]
        %v365 = vlaneseq
        %v366 = vshrl.u32 %v365, 7
        %v367 = vsub.s32 0, %v366
        %v368 = vrot.slane %v363, %v367
        %v369 = vlaneseq
        %v370 = vshrl.u32 %v369, 7
        %v371 = vsub.s32 1, %v370
        %v372 = vrot.slane %v363, %v371
        %v373 = vlaneseq
        %v374 = vshrl.u32 %v373, 7
        %v375 = vsub.s32 2, %v374
        %v376 = vrot.slane %v363, %v375
        %v377 = vlaneseq
        %v378 = vshrl.u32 %v377, 7
        %v379 = vsub.s32 3, %v378
        %v380 = vrot.slane %v363, %v379
        %v449 = vunpack.c.l.b16 %v299
        %v450 = vunpack.c.h.b16 %v299
        %v451 = vunpack.c.l.b16 %v300
        %v452 = vunpack.c.h.b16 %v300
        %v453 = vunpack.c.l.b16 %v301
        %v454 = vunpack.c.h.b16 %v301
        %v455 = vunpack.c.l.b16 %v302
        %v456 = vunpack.c.h.b16 %v302
        %v457 = vunpack.c.l.b16 %v303
        %v458 = vunpack.c.h.b16 %v303
        %v459 = vunpack.c.l.b16 %v304
        %v460 = vunpack.c.h.b16 %v304
        %v461 = vunpack.c.l.b16 %v305
        %v462 = vunpack.c.h.b16 %v305
        %v463 = vunpack.c.l.b16 %v306
        %v464 = vunpack.c.h.b16 %v306
        %v465 = vunpack.c.l.b16 %v307
        %v466 = vunpack.c.h.b16 %v307
        %v467 = vunpack.c.l.b16 %v308
        %v468 = vunpack.c.h.b16 %v308
        %v469 = vunpack.c.l.b16 %v309
        %v470 = vunpack.c.h.b16 %v309
        %v471 = vunpack.c.l.b16 %v310
        %v472 = vunpack.c.h.b16 %v310
        %v473 = vunpack.c.l.b16 %v311
        %v474 = vunpack.c.h.b16 %v311
        %v475 = vunpack.c.l.b16 %v312
        %v476 = vunpack.c.h.b16 %v312
        %v477 = vunpack.c.l.b16 %v313
        %v478 = vunpack.c.h.b16 %v313
        %v479 = vunpack.c.l.b16 %v314
        %v480 = vunpack.c.h.b16 %v314
        %v481 = vunpack.c.l.b16 %v315
        %v482 = vunpack.c.h.b16 %v315
        %v483 = vunpack.c.l.b16 %v316
        %v484 = vunpack.c.h.b16 %v316
        %v485 = vunpack.c.l.b16 %v317
        %v486 = vunpack.c.h.b16 %v317
        %v487 = vunpack.c.l.b16 %v318
        %v488 = vunpack.c.h.b16 %v318
        %v489 = vunpack.c.l.b16 %v319
        %v490 = vunpack.c.h.b16 %v319
        %v491 = vunpack.c.l.b16 %v320
        %v492 = vunpack.c.h.b16 %v320
        %v493 = vunpack.c.l.b16 %v321
        %v494 = vunpack.c.h.b16 %v321
        %v495 = vunpack.c.l.b16 %v322
        %v496 = vunpack.c.h.b16 %v322
        %v497 = vunpack.c.l.b16 %v323
        %v498 = vunpack.c.h.b16 %v323
        %v499 = vunpack.c.l.b16 %v324
        %v500 = vunpack.c.h.b16 %v324
        %v501 = vunpack.c.l.b16 %v325
        %v502 = vunpack.c.h.b16 %v325
        %v503 = vunpack.c.l.b16 %v326
        %v504 = vunpack.c.h.b16 %v326
        %v505 = vunpack.c.l.b16 %v327
        %v506 = vunpack.c.h.b16 %v327
        %v507 = vunpack.c.l.b16 %v328
        %v508 = vunpack.c.h.b16 %v328
        %v509 = vunpack.c.l.b16 %v329
        %v510 = vunpack.c.h.b16 %v329
        %v511 = vunpack.c.l.b16 %v330
        %v512 = vunpack.c.h.b16 %v330
        %v513 = vunpack.c.l.b16 %v331
        %v514 = vunpack.c.h.b16 %v331
        %v515 = vunpack.c.l.b16 %v332
        %v516 = vunpack.c.h.b16 %v332
        %v517 = vunpack.c.l.b16 %v333
        %v518 = vunpack.c.h.b16 %v333
        %v519 = vunpack.c.l.b16 %v334
        %v520 = vunpack.c.h.b16 %v334
        %v521 = vunpack.c.l.b16 %v335
        %v522 = vunpack.c.h.b16 %v335
        %v523 = vunpack.c.l.b16 %v336
        %v524 = vunpack.c.h.b16 %v336
        %v525 = vunpack.c.l.b16 %v337
        %v526 = vunpack.c.h.b16 %v337
        %v527 = vunpack.c.l.b16 %v338
        %v528 = vunpack.c.h.b16 %v338
        %v529 = vunpack.c.l.b16 %v339
        %v530 = vunpack.c.h.b16 %v339
        %v531 = vunpack.c.l.b16 %v340
        %v532 = vunpack.c.h.b16 %v340
        %v533 = vunpack.c.l.b16 %v341
        %v534 = vunpack.c.h.b16 %v341
        %v535 = vunpack.c.l.b16 %v342
        %v536 = vunpack.c.h.b16 %v342
        %v537 = vunpack.c.l.b16 %v343
        %v538 = vunpack.c.h.b16 %v343
        %v539 = vunpack.c.l.b16 %v344
        %v540 = vunpack.c.h.b16 %v344
        %v541 = vunpack.c.l.b16 %v345
        %v542 = vunpack.c.h.b16 %v345
        %v543 = vunpack.c.l.b16 %v346
        %v544 = vunpack.c.h.b16 %v346
        %v545 = vunpack.c.l.b16 %v347
        %v546 = vunpack.c.h.b16 %v347
        %v547 = vunpack.c.l.b16 %v348
        %v548 = vunpack.c.h.b16 %v348
        %v549 = vunpack.c.l.b16 %v349
        %v550 = vunpack.c.h.b16 %v349
        %v551 = vunpack.c.l.b16 %v350
        %v552 = vunpack.c.h.b16 %v350
        %v553 = vunpack.c.l.b16 %v351
        %v554 = vunpack.c.h.b16 %v351
        %v555 = vunpack.c.l.b16 %v352
        %v556 = vunpack.c.h.b16 %v352
        %v557 = vunpack.c.l.b16 %v353
        %v558 = vunpack.c.h.b16 %v353
        %v559 = vunpack.c.l.b16 %v354
        %v560 = vunpack.c.h.b16 %v354
        %v561 = vunpack.c.l.b16 %v355
        %v562 = vunpack.c.h.b16 %v355
        %v563 = vunpack.c.l.b16 %v356
        %v564 = vunpack.c.h.b16 %v356
        %v565 = vunpack.c.l.b16 %v357
        %v566 = vunpack.c.h.b16 %v357
        %v567 = vunpack.c.l.b16 %v358
        %v568 = vunpack.c.h.b16 %v358
        %v569 = vunpack.c.l.b16 %v359
        %v570 = vunpack.c.h.b16 %v359
        %v571 = vunpack.c.l.b16 %v360
        %v572 = vunpack.c.h.b16 %v360
        %v573 = vunpack.c.l.b16 %v361
        %v574 = vunpack.c.h.b16 %v361
        %v575 = vunpack.c.l.b16 %v362
        %v576 = vunpack.c.h.b16 %v362
        %v577 = vpack.c.b16 %v453, %v449
        %v578 = vpack.c.b16 %v454, %v450
        %v579 = vpack.c.b16 %v455, %v451
        %v580 = vpack.c.b16 %v456, %v452
        %v581 = vpack.c.b16 %v461, %v457
        %v582 = vpack.c.b16 %v462, %v458
        %v583 = vpack.c.b16 %v463, %v459
        %v584 = vpack.c.b16 %v464, %v460
        %v585 = vpack.c.b16 %v469, %v465
        %v586 = vpack.c.b16 %v470, %v466
        %v587 = vpack.c.b16 %v471, %v467
        %v588 = vpack.c.b16 %v472, %v468
        %v589 = vpack.c.b16 %v477, %v473
        %v590 = vpack.c.b16 %v478, %v474
        %v591 = vpack.c.b16 %v479, %v475
        %v592 = vpack.c.b16 %v480, %v476
        %v593 = vpack.c.b16 %v485, %v481
        %v594 = vpack.c.b16 %v486, %v482
        %v595 = vpack.c.b16 %v487, %v483
        %v596 = vpack.c.b16 %v488, %v484
        %v597 = vpack.c.b16 %v493, %v489
        %v598 = vpack.c.b16 %v494, %v490
        %v599 = vpack.c.b16 %v495, %v491
        %v600 = vpack.c.b16 %v496, %v492
        %v601 = vpack.c.b16 %v501, %v497
        %v602 = vpack.c.b16 %v502, %v498
        %v603 = vpack.c.b16 %v503, %v499
        %v604 = vpack.c.b16 %v504, %v500
        %v605 = vpack.c.b16 %v509, %v505
        %v606 = vpack.c.b16 %v510, %v506
        %v607 = vpack.c.b16 %v511, %v507
        %v608 = vpack.c.b16 %v512, %v508
        %v609 = vpack.c.b16 %v517, %v513
        %v610 = vpack.c.b16 %v518, %v514
        %v611 = vpack.c.b16 %v519, %v515
        %v612 = vpack.c.b16 %v520, %v516
        %v613 = vpack.c.b16 %v525, %v521
        %v614 = vpack.c.b16 %v526, %v522
        %v615 = vpack.c.b16 %v527, %v523
        %v616 = vpack.c.b16 %v528, %v524
        %v617 = vpack.c.b16 %v533, %v529
        %v618 = vpack.c.b16 %v534, %v530
        %v619 = vpack.c.b16 %v535, %v531
        %v620 = vpack.c.b16 %v536, %v532
        %v621 = vpack.c.b16 %v541, %v537
        %v622 = vpack.c.b16 %v542, %v538
        %v623 = vpack.c.b16 %v543, %v539
        %v624 = vpack.c.b16 %v544, %v540
        %v625 = vpack.c.b16 %v549, %v545
        %v626 = vpack.c.b16 %v550, %v546
        %v627 = vpack.c.b16 %v551, %v547
        %v628 = vpack.c.b16 %v552, %v548
        %v629 = vpack.c.b16 %v557, %v553
        %v630 = vpack.c.b16 %v558, %v554
        %v631 = vpack.c.b16 %v559, %v555
        %v632 = vpack.c.b16 %v560, %v556
        %v633 = vpack.c.b16 %v565, %v561
        %v634 = vpack.c.b16 %v566, %v562
        %v635 = vpack.c.b16 %v567, %v563
        %v636 = vpack.c.b16 %v568, %v564
        %v637 = vpack.c.b16 %v573, %v569
        %v638 = vpack.c.b16 %v574, %v570
        %v639 = vpack.c.b16 %v575, %v571
        %v640 = vpack.c.b16 %v576, %v572
        %705 = vmatprep.subr.bf16.mxu0 %v578
        %706 = vmatpush1.bf16.msra.mxu0 %v577
        %707 = vmatprep.subr.bf16.mxu0 %v582
        %708 = vmatpush1.bf16.msra.mxu0 %v581
        %709 = vmatprep.subr.bf16.mxu0 %v586
        %710 = vmatpush1.bf16.msra.mxu0 %v585
        %711 = vmatprep.subr.bf16.mxu0 %v590
        %712 = vmatpush1.bf16.msra.mxu0 %v589
        %713 = vmatprep.subr.bf16.mxu0 %v594
        %714 = vmatpush1.bf16.msra.mxu0 %v593
        %715 = vmatprep.subr.bf16.mxu0 %v598
        %716 = vmatpush1.bf16.msra.mxu0 %v597
        %717 = vmatprep.subr.bf16.mxu0 %v602
        %718 = vmatpush1.bf16.msra.mxu0 %v601
        %719 = vmatprep.subr.bf16.mxu0 %v606
        %720 = vmatpush1.bf16.msra.mxu0 %v605
        %721 = vmatprep.subr.bf16.mxu0 %v610
        %722 = vmatpush1.bf16.msra.mxu0 %v609
        %723 = vmatprep.subr.bf16.mxu0 %v614
        %724 = vmatpush1.bf16.msra.mxu0 %v613
        %725 = vmatprep.subr.bf16.mxu0 %v618
        %726 = vmatpush1.bf16.msra.mxu0 %v617
        %727 = vmatprep.subr.bf16.mxu0 %v622
        %728 = vmatpush1.bf16.msra.mxu0 %v621
        %729 = vmatprep.subr.bf16.mxu0 %v626
        %730 = vmatpush1.bf16.msra.mxu0 %v625
        %731 = vmatprep.subr.bf16.mxu0 %v630
        %732 = vmatpush1.bf16.msra.mxu0 %v629
        %733 = vmatprep.subr.bf16.mxu0 %v634
        %734 = vmatpush1.bf16.msra.mxu0 %v633
        %735 = vmatprep.subr.bf16.mxu0 %v638
        %736 = vmatpush1.bf16.msra.mxu0 %v637
        %737 = vmatprep.mubr.bf16.mxu0 %v292
        %738 = vmatmul.mubr.bf16.gmra.mrb[0].mxu0 %v291
        %v739 = vpop.f32.mrb[0].mxu0
        %v740 = vadd.f32 %v368, %v739
        %v741 = vpop.f32.mrb[0].mxu0
        %v742 = vadd.f32 %v372, %v741
        %v743 = vpop.f32.mrb[0].mxu0
        %v744 = vadd.f32 %v368, %v743
        %v745 = vpop.f32.mrb[0].mxu0
        %v746 = vadd.f32 %v372, %v745
        %747 = vmatprep.mubr.bf16.mxu0 %v294
        %748 = vmatmul.mubr.bf16.gmra.mrb[0].mxu0 %v293
        %v749 = vpop.f32.mrb[0].mxu0
        %v750 = vadd.f32 %v368, %v749
        %v751 = vpop.f32.mrb[0].mxu0
        %v752 = vadd.f32 %v372, %v751
        %v753 = vpop.f32.mrb[0].mxu0
        %v754 = vadd.f32 %v368, %v753
        %v755 = vpop.f32.mrb[0].mxu0
        %v756 = vadd.f32 %v372, %v755
        %757 = vmatprep.mubr.bf16.mxu0 %v296
        %758 = vmatmul.mubr.bf16.gmra.mrb[0].mxu0 %v295
        %v759 = vpop.f32.mrb[0].mxu0
        %v760 = vadd.f32 %v368, %v759
        %v761 = vpop.f32.mrb[0].mxu0
        %v762 = vadd.f32 %v372, %v761
        %v763 = vpop.f32.mrb[0].mxu0
        %v764 = vadd.f32 %v368, %v763
        %v765 = vpop.f32.mrb[0].mxu0
        %v766 = vadd.f32 %v372, %v765
        %767 = vmatprep.mubr.bf16.mxu0 %v298
        %768 = vmatmul.mubr.bf16.gmra.mrb[0].mxu0 %v297
        %v769 = vpop.f32.mrb[0].mxu0
        %v770 = vadd.f32 %v368, %v769
        %v771 = vpop.f32.mrb[0].mxu0
        %v772 = vadd.f32 %v372, %v771
        %v773 = vpop.f32.mrb[0].mxu0
        %v774 = vadd.f32 %v368, %v773
        %v775 = vpop.f32.mrb[0].mxu0
        %v776 = vadd.f32 %v372, %v775
        %777 = vdwg.mxu0
        %778 = vmatprep.subr.bf16.mxu0 %v580
        %779 = vmatpush1.bf16.msra.mxu0 %v579
        %780 = vmatprep.subr.bf16.mxu0 %v584
        %781 = vmatpush1.bf16.msra.mxu0 %v583
        %782 = vmatprep.subr.bf16.mxu0 %v588
        %783 = vmatpush1.bf16.msra.mxu0 %v587
        %784 = vmatprep.subr.bf16.mxu0 %v592
        %785 = vmatpush1.bf16.msra.mxu0 %v591
        %786 = vmatprep.subr.bf16.mxu0 %v596
        %787 = vmatpush1.bf16.msra.mxu0 %v595
        %788 = vmatprep.subr.bf16.mxu0 %v600
        %789 = vmatpush1.bf16.msra.mxu0 %v599
        %790 = vmatprep.subr.bf16.mxu0 %v604
        %791 = vmatpush1.bf16.msra.mxu0 %v603
        %792 = vmatprep.subr.bf16.mxu0 %v608
        %793 = vmatpush1.bf16.msra.mxu0 %v607
        %794 = vmatprep.subr.bf16.mxu0 %v612
        %795 = vmatpush1.bf16.msra.mxu0 %v611
        %796 = vmatprep.subr.bf16.mxu0 %v616
        %797 = vmatpush1.bf16.msra.mxu0 %v615
        %798 = vmatprep.subr.bf16.mxu0 %v620
        %799 = vmatpush1.bf16.msra.mxu0 %v619
        %800 = vmatprep.subr.bf16.mxu0 %v624
        %801 = vmatpush1.bf16.msra.mxu0 %v623
        %802 = vmatprep.subr.bf16.mxu0 %v628
        %803 = vmatpush1.bf16.msra.mxu0 %v627
        %804 = vmatprep.subr.bf16.mxu0 %v632
        %805 = vmatpush1.bf16.msra.mxu0 %v631
        %806 = vmatprep.subr.bf16.mxu0 %v636
        %807 = vmatpush1.bf16.msra.mxu0 %v635
        %808 = vmatprep.subr.bf16.mxu0 %v640
        %809 = vmatpush1.bf16.msra.mxu0 %v639
        %810 = vmatprep.mubr.bf16.mxu0 %v292
        %811 = vmatmul.mubr.bf16.gmra.mrb[0].mxu0 %v291
        %v812 = vpop.f32.mrb[0].mxu0
        %v813 = vadd.f32 %v376, %v812
        %v814 = vpop.f32.mrb[0].mxu0
        %v815 = vadd.f32 %v380, %v814
        %v816 = vpop.f32.mrb[0].mxu0
        %v817 = vadd.f32 %v376, %v816
        %v818 = vpop.f32.mrb[0].mxu0
        %v819 = vadd.f32 %v380, %v818
        %820 = vmatprep.mubr.bf16.mxu0 %v294
        %821 = vmatmul.mubr.bf16.gmra.mrb[0].mxu0 %v293
        %v822 = vpop.f32.mrb[0].mxu0
        %v823 = vadd.f32 %v376, %v822
        %v824 = vpop.f32.mrb[0].mxu0
        %v825 = vadd.f32 %v380, %v824
        %v826 = vpop.f32.mrb[0].mxu0
        %v827 = vadd.f32 %v376, %v826
        %v828 = vpop.f32.mrb[0].mxu0
        %v829 = vadd.f32 %v380, %v828
        %830 = vmatprep.mubr.bf16.mxu0 %v296
        %831 = vmatmul.mubr.bf16.gmra.mrb[0].mxu0 %v295
        %v832 = vpop.f32.mrb[0].mxu0
        %v833 = vadd.f32 %v376, %v832
        %v834 = vpop.f32.mrb[0].mxu0
        %v835 = vadd.f32 %v380, %v834
        %v836 = vpop.f32.mrb[0].mxu0
        %v837 = vadd.f32 %v376, %v836
        %v838 = vpop.f32.mrb[0].mxu0
        %v839 = vadd.f32 %v380, %v838
        %840 = vmatprep.mubr.bf16.mxu0 %v298
        %841 = vmatmul.mubr.bf16.gmra.mrb[0].mxu0 %v297
        %v842 = vpop.f32.mrb[0].mxu0
        %v843 = vadd.f32 %v376, %v842
        %v844 = vpop.f32.mrb[0].mxu0
        %v845 = vadd.f32 %v380, %v844
        %v846 = vpop.f32.mrb[0].mxu0
        %v847 = vadd.f32 %v376, %v846
        %v848 = vpop.f32.mrb[0].mxu0
        %v849 = vadd.f32 %v380, %v848
        %850 = vdwg.mxu0
        %v851 = vmax.f32 %v740, 0.0
        %v852 = vmax.f32 %v742, 0.0
        %v853 = vmax.f32 %v813, 0.0
        %v854 = vmax.f32 %v815, 0.0
        %v855 = vmax.f32 %v744, 0.0
        %v856 = vmax.f32 %v746, 0.0
        %v857 = vmax.f32 %v817, 0.0
        %v858 = vmax.f32 %v819, 0.0
        %v859 = vmax.f32 %v750, 0.0
        %v860 = vmax.f32 %v752, 0.0
        %v861 = vmax.f32 %v823, 0.0
        %v862 = vmax.f32 %v825, 0.0
        %v863 = vmax.f32 %v754, 0.0
        %v864 = vmax.f32 %v756, 0.0
        %v865 = vmax.f32 %v827, 0.0
        %v866 = vmax.f32 %v829, 0.0
        %v867 = vmax.f32 %v760, 0.0
        %v868 = vmax.f32 %v762, 0.0
        %v869 = vmax.f32 %v833, 0.0
        %v870 = vmax.f32 %v835, 0.0
        %v871 = vmax.f32 %v764, 0.0
        %v872 = vmax.f32 %v766, 0.0
        %v873 = vmax.f32 %v837, 0.0
        %v874 = vmax.f32 %v839, 0.0
        %v875 = vmax.f32 %v770, 0.0
        %v876 = vmax.f32 %v772, 0.0
        %v877 = vmax.f32 %v843, 0.0
        %v878 = vmax.f32 %v845, 0.0
        %v879 = vmax.f32 %v774, 0.0
        %v880 = vmax.f32 %v776, 0.0
        %v881 = vmax.f32 %v847, 0.0
        %v882 = vmax.f32 %v849, 0.0
        %v883 = vpack.c.bf16 %v855, %v851
        %v884 = vpack.c.bf16 %v856, %v852
        %v885 = vpack.c.bf16 %v857, %v853
        %v886 = vpack.c.bf16 %v858, %v854
        %v887 = vpack.c.bf16 %v863, %v859
        %v888 = vpack.c.bf16 %v864, %v860
        %v889 = vpack.c.bf16 %v865, %v861
        %v890 = vpack.c.bf16 %v866, %v862
        %v891 = vpack.c.bf16 %v871, %v867
        %v892 = vpack.c.bf16 %v872, %v868
        %v893 = vpack.c.bf16 %v873, %v869
        %v894 = vpack.c.bf16 %v874, %v870
        %v895 = vpack.c.bf16 %v879, %v875
        %v896 = vpack.c.bf16 %v880, %v876
        %v897 = vpack.c.bf16 %v881, %v877
        %v898 = vpack.c.bf16 %v882, %v878
        %v899 = vld [vmem:[#allocation7] sm:$0xff]
        %v900 = vld [vmem:[#allocation7 + $0x8] sm:$0xff]
        %v901 = vld [vmem:[#allocation7 + $0x10] sm:$0xff]
        %v902 = vld [vmem:[#allocation7 + $0x18] sm:$0xff]
        %v903 = vld [vmem:[#allocation7 + $0x20] sm:$0xff]
        %v904 = vld [vmem:[#allocation7 + $0x28] sm:$0xff]
        %v905 = vld [vmem:[#allocation7 + $0x30] sm:$0xff]
        %v906 = vld [vmem:[#allocation7 + $0x38] sm:$0xff]
        %v907 = vld [vmem:[#allocation7 + $0x40] sm:$0xff]
        %v908 = vld [vmem:[#allocation7 + $0x48] sm:$0xff]
        %v909 = vld [vmem:[#allocation7 + $0x50] sm:$0xff]
        %v910 = vld [vmem:[#allocation7 + $0x58] sm:$0xff]
        %v911 = vld [vmem:[#allocation7 + $0x60] sm:$0xff]
        %v912 = vld [vmem:[#allocation7 + $0x68] sm:$0xff]
        %v913 = vld [vmem:[#allocation7 + $0x70] sm:$0xff]
        %v914 = vld [vmem:[#allocation7 + $0x78] sm:$0xff]
        %v915 = vld [vmem:[#allocation7 + $0x80] sm:$0xff]
        %v916 = vld [vmem:[#allocation7 + $0x88] sm:$0xff]
        %v917 = vld [vmem:[#allocation7 + $0x90] sm:$0xff]
        %v918 = vld [vmem:[#allocation7 + $0x98] sm:$0xff]
        %v919 = vld [vmem:[#allocation7 + $0xa0] sm:$0xff]
        %v920 = vld [vmem:[#allocation7 + $0xa8] sm:$0xff]
        %v921 = vld [vmem:[#allocation7 + $0xb0] sm:$0xff]
        %v922 = vld [vmem:[#allocation7 + $0xb8] sm:$0xff]
        %v923 = vld [vmem:[#allocation7 + $0xc0] sm:$0xff]
        %v924 = vld [vmem:[#allocation7 + $0xc8] sm:$0xff]
        %v925 = vld [vmem:[#allocation7 + $0xd0] sm:$0xff]
        %v926 = vld [vmem:[#allocation7 + $0xd8] sm:$0xff]
        %v927 = vld [vmem:[#allocation7 + $0xe0] sm:$0xff]
        %v928 = vld [vmem:[#allocation7 + $0xe8] sm:$0xff]
        %v929 = vld [vmem:[#allocation7 + $0xf0] sm:$0xff]
        %v930 = vld [vmem:[#allocation7 + $0xf8] sm:$0xff]
        %v931 = vld [vmem:[#allocation7 + $0x100] sm:$0xff]
        %v932 = vld [vmem:[#allocation7 + $0x108] sm:$0xff]
        %v933 = vld [vmem:[#allocation7 + $0x110] sm:$0xff]
        %v934 = vld [vmem:[#allocation7 + $0x118] sm:$0xff]
        %v935 = vld [vmem:[#allocation7 + $0x120] sm:$0xff]
        %v936 = vld [vmem:[#allocation7 + $0x128] sm:$0xff]
        %v937 = vld [vmem:[#allocation7 + $0x130] sm:$0xff]
        %v938 = vld [vmem:[#allocation7 + $0x138] sm:$0xff]
        %v939 = vld [vmem:[#allocation7 + $0x140] sm:$0xff]
        %v940 = vld [vmem:[#allocation7 + $0x148] sm:$0xff]
        %v941 = vld [vmem:[#allocation7 + $0x150] sm:$0xff]
        %v942 = vld [vmem:[#allocation7 + $0x158] sm:$0xff]
        %v943 = vld [vmem:[#allocation7 + $0x160] sm:$0xff]
        %v944 = vld [vmem:[#allocation7 + $0x168] sm:$0xff]
        %v945 = vld [vmem:[#allocation7 + $0x170] sm:$0xff]
        %v946 = vld [vmem:[#allocation7 + $0x178] sm:$0xff]
        %v947 = vld [vmem:[#allocation7 + $0x180] sm:$0xff]
        %v948 = vld [vmem:[#allocation7 + $0x188] sm:$0xff]
        %v949 = vld [vmem:[#allocation7 + $0x190] sm:$0xff]
        %v950 = vld [vmem:[#allocation7 + $0x198] sm:$0xff]
        %v951 = vld [vmem:[#allocation7 + $0x1a0] sm:$0xff]
        %v952 = vld [vmem:[#allocation7 + $0x1a8] sm:$0xff]
        %v953 = vld [vmem:[#allocation7 + $0x1b0] sm:$0xff]
        %v954 = vld [vmem:[#allocation7 + $0x1b8] sm:$0xff]
        %v955 = vld [vmem:[#allocation7 + $0x1c0] sm:$0xff]
        %v956 = vld [vmem:[#allocation7 + $0x1c8] sm:$0xff]
        %v957 = vld [vmem:[#allocation7 + $0x1d0] sm:$0xff]
        %v958 = vld [vmem:[#allocation7 + $0x1d8] sm:$0xff]
        %v959 = vld [vmem:[#allocation7 + $0x1e0] sm:$0xff]
        %v960 = vld [vmem:[#allocation7 + $0x1e8] sm:$0xff]
        %v961 = vld [vmem:[#allocation7 + $0x1f0] sm:$0xff]
        %v962 = vld [vmem:[#allocation7 + $0x1f8] sm:$0xff]
        %v963 = vld [vmem:[%s4] sm:$0x3]
        %v965 = vlaneseq
        %v966 = vshrl.u32 %v965, 7
        %v967 = vsub.s32 0, %v966
        %v968 = vrot.slane %v963, %v967
        %v969 = vlaneseq
        %v970 = vshrl.u32 %v969, 7
        %v971 = vsub.s32 1, %v970
        %v972 = vrot.slane %v963, %v971
        %v1039 = vunpack.c.l.b16 %v899
        %v1040 = vunpack.c.h.b16 %v899
        %v1041 = vunpack.c.l.b16 %v900
        %v1042 = vunpack.c.h.b16 %v900
        %v1043 = vunpack.c.l.b16 %v901
        %v1044 = vunpack.c.h.b16 %v901
        %v1045 = vunpack.c.l.b16 %v902
        %v1046 = vunpack.c.h.b16 %v902
        %v1047 = vunpack.c.l.b16 %v903
        %v1048 = vunpack.c.h.b16 %v903
        %v1049 = vunpack.c.l.b16 %v904
        %v1050 = vunpack.c.h.b16 %v904
        %v1051 = vunpack.c.l.b16 %v905
        %v1052 = vunpack.c.h.b16 %v905
        %v1053 = vunpack.c.l.b16 %v906
        %v1054 = vunpack.c.h.b16 %v906
        %v1055 = vunpack.c.l.b16 %v907
        %v1056 = vunpack.c.h.b16 %v907
        %v1057 = vunpack.c.l.b16 %v908
        %v1058 = vunpack.c.h.b16 %v908
        %v1059 = vunpack.c.l.b16 %v909
        %v1060 = vunpack.c.h.b16 %v909
        %v1061 = vunpack.c.l.b16 %v910
        %v1062 = vunpack.c.h.b16 %v910
        %v1063 = vunpack.c.l.b16 %v911
        %v1064 = vunpack.c.h.b16 %v911
        %v1065 = vunpack.c.l.b16 %v912
        %v1066 = vunpack.c.h.b16 %v912
        %v1067 = vunpack.c.l.b16 %v913
        %v1068 = vunpack.c.h.b16 %v913
        %v1069 = vunpack.c.l.b16 %v914
        %v1070 = vunpack.c.h.b16 %v914
        %v1071 = vunpack.c.l.b16 %v915
        %v1072 = vunpack.c.h.b16 %v915
        %v1073 = vunpack.c.l.b16 %v916
        %v1074 = vunpack.c.h.b16 %v916
        %v1075 = vunpack.c.l.b16 %v917
        %v1076 = vunpack.c.h.b16 %v917
        %v1077 = vunpack.c.l.b16 %v918
        %v1078 = vunpack.c.h.b16 %v918
        %v1079 = vunpack.c.l.b16 %v919
        %v1080 = vunpack.c.h.b16 %v919
        %v1081 = vunpack.c.l.b16 %v920
        %v1082 = vunpack.c.h.b16 %v920
        %v1083 = vunpack.c.l.b16 %v921
        %v1084 = vunpack.c.h.b16 %v921
        %v1085 = vunpack.c.l.b16 %v922
        %v1086 = vunpack.c.h.b16 %v922
        %v1087 = vunpack.c.l.b16 %v923
        %v1088 = vunpack.c.h.b16 %v923
        %v1089 = vunpack.c.l.b16 %v924
        %v1090 = vunpack.c.h.b16 %v924
        %v1091 = vunpack.c.l.b16 %v925
        %v1092 = vunpack.c.h.b16 %v925
        %v1093 = vunpack.c.l.b16 %v926
        %v1094 = vunpack.c.h.b16 %v926
        %v1095 = vunpack.c.l.b16 %v927
        %v1096 = vunpack.c.h.b16 %v927
        %v1097 = vunpack.c.l.b16 %v928
        %v1098 = vunpack.c.h.b16 %v928
        %v1099 = vunpack.c.l.b16 %v929
        %v1100 = vunpack.c.h.b16 %v929
        %v1101 = vunpack.c.l.b16 %v930
        %v1102 = vunpack.c.h.b16 %v930
        %v1103 = vunpack.c.l.b16 %v931
        %v1104 = vunpack.c.h.b16 %v931
        %v1105 = vunpack.c.l.b16 %v932
        %v1106 = vunpack.c.h.b16 %v932
        %v1107 = vunpack.c.l.b16 %v933
        %v1108 = vunpack.c.h.b16 %v933
        %v1109 = vunpack.c.l.b16 %v934
        %v1110 = vunpack.c.h.b16 %v934
        %v1111 = vunpack.c.l.b16 %v935
        %v1112 = vunpack.c.h.b16 %v935
        %v1113 = vunpack.c.l.b16 %v936
        %v1114 = vunpack.c.h.b16 %v936
        %v1115 = vunpack.c.l.b16 %v937
        %v1116 = vunpack.c.h.b16 %v937
        %v1117 = vunpack.c.l.b16 %v938
        %v1118 = vunpack.c.h.b16 %v938
        %v1119 = vunpack.c.l.b16 %v939
        %v1120 = vunpack.c.h.b16 %v939
        %v1121 = vunpack.c.l.b16 %v940
        %v1122 = vunpack.c.h.b16 %v940
        %v1123 = vunpack.c.l.b16 %v941
        %v1124 = vunpack.c.h.b16 %v941
        %v1125 = vunpack.c.l.b16 %v942
        %v1126 = vunpack.c.h.b16 %v942
        %v1127 = vunpack.c.l.b16 %v943
        %v1128 = vunpack.c.h.b16 %v943
        %v1129 = vunpack.c.l.b16 %v944
        %v1130 = vunpack.c.h.b16 %v944
        %v1131 = vunpack.c.l.b16 %v945
        %v1132 = vunpack.c.h.b16 %v945
        %v1133 = vunpack.c.l.b16 %v946
        %v1134 = vunpack.c.h.b16 %v946
        %v1135 = vunpack.c.l.b16 %v947
        %v1136 = vunpack.c.h.b16 %v947
        %v1137 = vunpack.c.l.b16 %v948
        %v1138 = vunpack.c.h.b16 %v948
        %v1139 = vunpack.c.l.b16 %v949
        %v1140 = vunpack.c.h.b16 %v949
        %v1141 = vunpack.c.l.b16 %v950
        %v1142 = vunpack.c.h.b16 %v950
        %v1143 = vunpack.c.l.b16 %v951
        %v1144 = vunpack.c.h.b16 %v951
        %v1145 = vunpack.c.l.b16 %v952
        %v1146 = vunpack.c.h.b16 %v952
        %v1147 = vunpack.c.l.b16 %v953
        %v1148 = vunpack.c.h.b16 %v953
        %v1149 = vunpack.c.l.b16 %v954
        %v1150 = vunpack.c.h.b16 %v954
        %v1151 = vunpack.c.l.b16 %v955
        %v1152 = vunpack.c.h.b16 %v955
        %v1153 = vunpack.c.l.b16 %v956
        %v1154 = vunpack.c.h.b16 %v956
        %v1155 = vunpack.c.l.b16 %v957
        %v1156 = vunpack.c.h.b16 %v957
        %v1157 = vunpack.c.l.b16 %v958
        %v1158 = vunpack.c.h.b16 %v958
        %v1159 = vunpack.c.l.b16 %v959
        %v1160 = vunpack.c.h.b16 %v959
        %v1161 = vunpack.c.l.b16 %v960
        %v1162 = vunpack.c.h.b16 %v960
        %v1163 = vunpack.c.l.b16 %v961
        %v1164 = vunpack.c.h.b16 %v961
        %v1165 = vunpack.c.l.b16 %v962
        %v1166 = vunpack.c.h.b16 %v962
        %v1167 = vpack.c.b16 %v1041, %v1039
        %v1168 = vpack.c.b16 %v1042, %v1040
        %v1169 = vpack.c.b16 %v1045, %v1043
        %v1170 = vpack.c.b16 %v1046, %v1044
        %v1171 = vpack.c.b16 %v1049, %v1047
        %v1172 = vpack.c.b16 %v1050, %v1048
        %v1173 = vpack.c.b16 %v1053, %v1051
        %v1174 = vpack.c.b16 %v1054, %v1052
        %v1175 = vpack.c.b16 %v1057, %v1055
        %v1176 = vpack.c.b16 %v1058, %v1056
        %v1177 = vpack.c.b16 %v1061, %v1059
        %v1178 = vpack.c.b16 %v1062, %v1060
        %v1179 = vpack.c.b16 %v1065, %v1063
        %v1180 = vpack.c.b16 %v1066, %v1064
        %v1181 = vpack.c.b16 %v1069, %v1067
        %v1182 = vpack.c.b16 %v1070, %v1068
        %v1183 = vpack.c.b16 %v1073, %v1071
        %v1184 = vpack.c.b16 %v1074, %v1072
        %v1185 = vpack.c.b16 %v1077, %v1075
        %v1186 = vpack.c.b16 %v1078, %v1076
        %v1187 = vpack.c.b16 %v1081, %v1079
        %v1188 = vpack.c.b16 %v1082, %v1080
        %v1189 = vpack.c.b16 %v1085, %v1083
        %v1190 = vpack.c.b16 %v1086, %v1084
        %v1191 = vpack.c.b16 %v1089, %v1087
        %v1192 = vpack.c.b16 %v1090, %v1088
        %v1193 = vpack.c.b16 %v1093, %v1091
        %v1194 = vpack.c.b16 %v1094, %v1092
        %v1195 = vpack.c.b16 %v1097, %v1095
        %v1196 = vpack.c.b16 %v1098, %v1096
        %v1197 = vpack.c.b16 %v1101, %v1099
        %v1198 = vpack.c.b16 %v1102, %v1100
        %v1199 = vpack.c.b16 %v1105, %v1103
        %v1200 = vpack.c.b16 %v1106, %v1104
        %v1201 = vpack.c.b16 %v1109, %v1107
        %v1202 = vpack.c.b16 %v1110, %v1108
        %v1203 = vpack.c.b16 %v1113, %v1111
        %v1204 = vpack.c.b16 %v1114, %v1112
        %v1205 = vpack.c.b16 %v1117, %v1115
        %v1206 = vpack.c.b16 %v1118, %v1116
        %v1207 = vpack.c.b16 %v1121, %v1119
        %v1208 = vpack.c.b16 %v1122, %v1120
        %v1209 = vpack.c.b16 %v1125, %v1123
        %v1210 = vpack.c.b16 %v1126, %v1124
        %v1211 = vpack.c.b16 %v1129, %v1127
        %v1212 = vpack.c.b16 %v1130, %v1128
        %v1213 = vpack.c.b16 %v1133, %v1131
        %v1214 = vpack.c.b16 %v1134, %v1132
        %v1215 = vpack.c.b16 %v1137, %v1135
        %v1216 = vpack.c.b16 %v1138, %v1136
        %v1217 = vpack.c.b16 %v1141, %v1139
        %v1218 = vpack.c.b16 %v1142, %v1140
        %v1219 = vpack.c.b16 %v1145, %v1143
        %v1220 = vpack.c.b16 %v1146, %v1144
        %v1221 = vpack.c.b16 %v1149, %v1147
        %v1222 = vpack.c.b16 %v1150, %v1148
        %v1223 = vpack.c.b16 %v1153, %v1151
        %v1224 = vpack.c.b16 %v1154, %v1152
        %v1225 = vpack.c.b16 %v1157, %v1155
        %v1226 = vpack.c.b16 %v1158, %v1156
        %v1227 = vpack.c.b16 %v1161, %v1159
        %v1228 = vpack.c.b16 %v1162, %v1160
        %v1229 = vpack.c.b16 %v1165, %v1163
        %v1230 = vpack.c.b16 %v1166, %v1164
        %1295 = vmatprep.subr.bf16.mxu0 %v1168
        %1296 = vmatpush1.bf16.msra.mxu0 %v1167
        %1297 = vmatprep.subr.bf16.mxu0 %v1170
        %1298 = vmatpush1.bf16.msra.mxu0 %v1169
        %1299 = vmatprep.subr.bf16.mxu0 %v1172
        %1300 = vmatpush1.bf16.msra.mxu0 %v1171
        %1301 = vmatprep.subr.bf16.mxu0 %v1174
        %1302 = vmatpush1.bf16.msra.mxu0 %v1173
        %1303 = vmatprep.subr.bf16.mxu0 %v1176
        %1304 = vmatpush1.bf16.msra.mxu0 %v1175
        %1305 = vmatprep.subr.bf16.mxu0 %v1178
        %1306 = vmatpush1.bf16.msra.mxu0 %v1177
        %1307 = vmatprep.subr.bf16.mxu0 %v1180
        %1308 = vmatpush1.bf16.msra.mxu0 %v1179
        %1309 = vmatprep.subr.bf16.mxu0 %v1182
        %1310 = vmatpush1.bf16.msra.mxu0 %v1181
        %1311 = vmatprep.subr.bf16.mxu0 %v1184
        %1312 = vmatpush1.bf16.msra.mxu0 %v1183
        %1313 = vmatprep.subr.bf16.mxu0 %v1186
        %1314 = vmatpush1.bf16.msra.mxu0 %v1185
        %1315 = vmatprep.subr.bf16.mxu0 %v1188
        %1316 = vmatpush1.bf16.msra.mxu0 %v1187
        %1317 = vmatprep.subr.bf16.mxu0 %v1190
        %1318 = vmatpush1.bf16.msra.mxu0 %v1189
        %1319 = vmatprep.subr.bf16.mxu0 %v1192
        %1320 = vmatpush1.bf16.msra.mxu0 %v1191
        %1321 = vmatprep.subr.bf16.mxu0 %v1194
        %1322 = vmatpush1.bf16.msra.mxu0 %v1193
        %1323 = vmatprep.subr.bf16.mxu0 %v1196
        %1324 = vmatpush1.bf16.msra.mxu0 %v1195
        %1325 = vmatprep.subr.bf16.mxu0 %v1198
        %1326 = vmatpush1.bf16.msra.mxu0 %v1197
        %1327 = vmatprep.mubr.bf16.mxu0 %v884
        %1328 = vmatmul.mubr.bf16.gmra.mrb[0].mxu0 %v883
        %v1329 = vpop.f32.mrb[0].mxu0
        %v1330 = vadd.f32 %v968, %v1329
        %v1331 = vpop.f32.mrb[0].mxu0
        %v1332 = vadd.f32 %v972, %v1331
        %v1333 = vpop.f32.mrb[0].mxu0
        %v1334 = vadd.f32 %v968, %v1333
        %v1335 = vpop.f32.mrb[0].mxu0
        %v1336 = vadd.f32 %v972, %v1335
        %1337 = vmatprep.mubr.bf16.mxu0 %v888
        %1338 = vmatmul.mubr.bf16.gmra.mrb[0].mxu0 %v887
        %v1339 = vpop.f32.mrb[0].mxu0
        %v1340 = vadd.f32 %v968, %v1339
        %v1341 = vpop.f32.mrb[0].mxu0
        %v1342 = vadd.f32 %v972, %v1341
        %v1343 = vpop.f32.mrb[0].mxu0
        %v1344 = vadd.f32 %v968, %v1343
        %v1345 = vpop.f32.mrb[0].mxu0
        %v1346 = vadd.f32 %v972, %v1345
        %1347 = vmatprep.mubr.bf16.mxu0 %v892
        %1348 = vmatmul.mubr.bf16.gmra.mrb[0].mxu0 %v891
        %v1349 = vpop.f32.mrb[0].mxu0
        %v1350 = vadd.f32 %v968, %v1349
        %v1351 = vpop.f32.mrb[0].mxu0
        %v1352 = vadd.f32 %v972, %v1351
        %v1353 = vpop.f32.mrb[0].mxu0
        %v1354 = vadd.f32 %v968, %v1353
        %v1355 = vpop.f32.mrb[0].mxu0
        %v1356 = vadd.f32 %v972, %v1355
        %1357 = vmatprep.mubr.bf16.mxu0 %v896
        %1358 = vmatmul.mubr.bf16.gmra.mrb[0].mxu0 %v895
        %v1359 = vpop.f32.mrb[0].mxu0
        %v1360 = vadd.f32 %v968, %v1359
        %v1361 = vpop.f32.mrb[0].mxu0
        %v1362 = vadd.f32 %v972, %v1361
        %v1363 = vpop.f32.mrb[0].mxu0
        %v1364 = vadd.f32 %v968, %v1363
        %v1365 = vpop.f32.mrb[0].mxu0
        %v1366 = vadd.f32 %v972, %v1365
        %1367 = vdwg.mxu0
        %1368 = vmatprep.subr.bf16.mxu0 %v1200
        %1369 = vmatpush1.bf16.msra.mxu0 %v1199
        %1370 = vmatprep.subr.bf16.mxu0 %v1202
        %1371 = vmatpush1.bf16.msra.mxu0 %v1201
        %1372 = vmatprep.subr.bf16.mxu0 %v1204
        %1373 = vmatpush1.bf16.msra.mxu0 %v1203
        %1374 = vmatprep.subr.bf16.mxu0 %v1206
        %1375 = vmatpush1.bf16.msra.mxu0 %v1205
        %1376 = vmatprep.subr.bf16.mxu0 %v1208
        %1377 = vmatpush1.bf16.msra.mxu0 %v1207
        %1378 = vmatprep.subr.bf16.mxu0 %v1210
        %1379 = vmatpush1.bf16.msra.mxu0 %v1209
        %1380 = vmatprep.subr.bf16.mxu0 %v1212
        %1381 = vmatpush1.bf16.msra.mxu0 %v1211
        %1382 = vmatprep.subr.bf16.mxu0 %v1214
        %1383 = vmatpush1.bf16.msra.mxu0 %v1213
        %1384 = vmatprep.subr.bf16.mxu0 %v1216
        %1385 = vmatpush1.bf16.msra.mxu0 %v1215
        %1386 = vmatprep.subr.bf16.mxu0 %v1218
        %1387 = vmatpush1.bf16.msra.mxu0 %v1217
        %1388 = vmatprep.subr.bf16.mxu0 %v1220
        %1389 = vmatpush1.bf16.msra.mxu0 %v1219
        %1390 = vmatprep.subr.bf16.mxu0 %v1222
        %1391 = vmatpush1.bf16.msra.mxu0 %v1221
        %1392 = vmatprep.subr.bf16.mxu0 %v1224
        %1393 = vmatpush1.bf16.msra.mxu0 %v1223
        %1394 = vmatprep.subr.bf16.mxu0 %v1226
        %1395 = vmatpush1.bf16.msra.mxu0 %v1225
        %1396 = vmatprep.subr.bf16.mxu0 %v1228
        %1397 = vmatpush1.bf16.msra.mxu0 %v1227
        %1398 = vmatprep.subr.bf16.mxu0 %v1230
        %1399 = vmatpush1.bf16.msra.mxu0 %v1229
        %1400 = vmatprep.mubr.bf16.mxu0 %v886
        %1401 = vmatmul.mubr.bf16.gmra.mrb[0].mxu0 %v885
        %v1402 = vpop.f32.mrb[0].mxu0
        %v1403 = vadd.f32 %v1330, %v1402
        %v1404 = vpop.f32.mrb[0].mxu0
        %v1405 = vadd.f32 %v1332, %v1404
        %v1406 = vpop.f32.mrb[0].mxu0
        %v1407 = vadd.f32 %v1334, %v1406
        %v1408 = vpop.f32.mrb[0].mxu0
        %v1409 = vadd.f32 %v1336, %v1408
        %1410 = vmatprep.mubr.bf16.mxu0 %v890
        %1411 = vmatmul.mubr.bf16.gmra.mrb[0].mxu0 %v889
        %v1412 = vpop.f32.mrb[0].mxu0
        %v1413 = vadd.f32 %v1340, %v1412
        %v1414 = vpop.f32.mrb[0].mxu0
        %v1415 = vadd.f32 %v1342, %v1414
        %v1416 = vpop.f32.mrb[0].mxu0
        %v1417 = vadd.f32 %v1344, %v1416
        %v1418 = vpop.f32.mrb[0].mxu0
        %v1419 = vadd.f32 %v1346, %v1418
        %1420 = vmatprep.mubr.bf16.mxu0 %v894
        %1421 = vmatmul.mubr.bf16.gmra.mrb[0].mxu0 %v893
        %v1422 = vpop.f32.mrb[0].mxu0
        %v1423 = vadd.f32 %v1350, %v1422
        %v1424 = vpop.f32.mrb[0].mxu0
        %v1425 = vadd.f32 %v1352, %v1424
        %v1426 = vpop.f32.mrb[0].mxu0
        %v1427 = vadd.f32 %v1354, %v1426
        %v1428 = vpop.f32.mrb[0].mxu0
        %v1429 = vadd.f32 %v1356, %v1428
        %1430 = vmatprep.mubr.bf16.mxu0 %v898
        %1431 = vmatmul.mubr.bf16.gmra.mrb[0].mxu0 %v897
        %v1432 = vpop.f32.mrb[0].mxu0
        %v1433 = vadd.f32 %v1360, %v1432
        %v1434 = vpop.f32.mrb[0].mxu0
        %v1435 = vadd.f32 %v1362, %v1434
        %v1436 = vpop.f32.mrb[0].mxu0
        %v1437 = vadd.f32 %v1364, %v1436
        %v1438 = vpop.f32.mrb[0].mxu0
        %v1439 = vadd.f32 %v1366, %v1438
        %1440 = vdwg.mxu0
        %v1441 = vmax.f32 %v1403, 0.0
        %v1442 = vmax.f32 %v1405, 0.0
        %v1443 = vmax.f32 %v1407, 0.0
        %v1444 = vmax.f32 %v1409, 0.0
        %v1445 = vmax.f32 %v1413, 0.0
        %v1446 = vmax.f32 %v1415, 0.0
        %v1447 = vmax.f32 %v1417, 0.0
        %v1448 = vmax.f32 %v1419, 0.0
        %v1449 = vmax.f32 %v1423, 0.0
        %v1450 = vmax.f32 %v1425, 0.0
        %v1451 = vmax.f32 %v1427, 0.0
        %v1452 = vmax.f32 %v1429, 0.0
        %v1453 = vmax.f32 %v1433, 0.0
        %v1454 = vmax.f32 %v1435, 0.0
        %v1455 = vmax.f32 %v1437, 0.0
        %v1456 = vmax.f32 %v1439, 0.0
        %1457 = vst [vmem:[%s272] sm:$0xff] %v1441
        %1458 = vst [vmem:[%s272 + $0x8] sm:$0xff] %v1442
        %1459 = vst [vmem:[%s272 + $0x10] sm:$0xff] %v1443
        %1460 = vst [vmem:[%s272 + $0x18] sm:$0xff] %v1444
        %1461 = vst [vmem:[%s272 + $0x20] sm:$0xff] %v1445
        %1462 = vst [vmem:[%s272 + $0x28] sm:$0xff] %v1446
        %1463 = vst [vmem:[%s272 + $0x30] sm:$0xff] %v1447
        %1464 = vst [vmem:[%s272 + $0x38] sm:$0xff] %v1448
        %1465 = vst [vmem:[%s272 + $0x40] sm:$0xff] %v1449
        %1466 = vst [vmem:[%s272 + $0x48] sm:$0xff] %v1450
        %1467 = vst [vmem:[%s272 + $0x50] sm:$0xff] %v1451
        %1468 = vst [vmem:[%s272 + $0x58] sm:$0xff] %v1452
        %1469 = vst [vmem:[%s272 + $0x60] sm:$0xff] %v1453
        %1470 = vst [vmem:[%s272 + $0x68] sm:$0xff] %v1454
        %1471 = vst [vmem:[%s272 + $0x70] sm:$0xff] %v1455
        %1472 = vst [vmem:[%s272 + $0x78] sm:$0xff] %v1456
        %s1473 = sand.u32 %s141, 1
        %s1474 = scalar_lea.sflag [#allocation4], %s1473
        %s1475 = sand.u32 %s141, 1
        %s1476 = smul.addr %s1475, 128
        %s1477 = scalar_lea.vmem [#allocation8], %s1476
        // Predicated region
        $region53: #{tpu_custom_call.1} parent=39 // pred_check
          %p1478 = pneg %p151
        $region54: #{tpu_custom_call.1} parent=39 // pred_check_branch
          %1480 = sbr.rel (%p1478) target = $region56
        $region55: #{tpu_custom_call.1} parent=39 // pred_region
          %s1481 = smul.u32 8, %s23
          %s1483 = ssub.s32 2048, 2048
          %1484 = vsyncadd %s1474, %s1483
          %s1485 = smul.addr %s1481, 2
          %s1486 = smul.addr %s1485, 128
          %s1487 = scalar_lea.hbm %s5, %s1486
          %s1488 = sshll.u32 %s1477, 4
          %s1489 = int_to_ptr.vmem [resolvable:$true] %s1488
          %1494 = dma.vmem_to_hbm [thread:$0]  %s1489, 2048, %s1487, %s1474, 256, 256, 16
        $region56: #{tpu_custom_call.1} parent=39 // pred_fallthru
          _
      $region40: #{tpu_custom_call.1} parent=5 // pred_fallthru
        _
      %p1495 = scmp.le.s32.totalorder 2, %s18
      // Predicated region
      $region57: #{tpu_custom_call.1} parent=5 // pred_check
        %p1496 = pneg %p1495
      $region58: #{tpu_custom_call.1} parent=5 // pred_check_branch
        %1498 = sbr.rel (%p1496) target = $region60
      $region59: #{tpu_custom_call.1} parent=5 // pred_region
        %s1499 = ssub.s32 %s18, 2
        // Predicated region
        $region61: #{tpu_custom_call.1} parent=59 // pred_check
          %p1500 = pneg %p157
        $region62: #{tpu_custom_call.1} parent=59 // pred_check_branch
          %1502 = sbr.rel (%p1500) target = $region64
        $region63: #{tpu_custom_call.1} parent=59 // pred_region
          %s1503 = sand.u32 %s142, 1
          %s1504 = scalar_lea.sflag [#allocation4], %s1503
          %s1505 = sand.u32 %s142, 1
          %s1506 = smul.addr %s1505, 128
          %s1507 = scalar_lea.vmem [#allocation8], %s1506
          %1508 = dma.done %s1504, 2048
        $region64: #{tpu_custom_call.1} parent=59 // pred_fallthru
          _
      $region60: #{tpu_custom_call.1} parent=5 // pred_fallthru
        _
    $region6: #{tpu_custom_call.1} parent=1 // loop_footer
      %s22 = sadd.s32 1, %s18
    $region7: #{tpu_custom_call.1} parent=1 // loop_footer_branch
      %17 = sbr.rel target = $region3
    $region8: #{tpu_custom_call.1} parent=1 // loop_exit
      _
    %1509 = vsyncpa [#allocation3], 1
    %s1510 = scalar_lea.sflag [#allocation3], 1
    %1511 = vsyncpa %s1510, 1
    %1512 = vsyncpa [#allocation6], 1
    %1513 = vsyncpa [#allocation4], 1
    %s1514 = scalar_lea.sflag [#allocation4], 1
    %1515 = vsyncpa %s1514, 1

</llo_original>
